<compile_context>
chip_gen: v7x
topology: tpu7x:2x2x1
jax: 0.10.0
libtpu: 0.0.40
codegen_flags: <defaults>
</compile_context>

<pallas_src>
import functools

import numpy as np
import jax
import jax.numpy as jnp
from jax.experimental import pallas as pl
from jax.experimental.pallas import tpu as pltpu


def _round_up(x: int, m: int) -> int:
    return (x + m - 1) // m * m


def _bilinear_up2_matrix(n_in: int) -> np.ndarray:
    """(2*n_in, n_in) 1-D operator matching
    F.interpolate(scale_factor=2, mode='bilinear', align_corners=False)."""
    n_out = 2 * n_in
    scale = n_in / n_out
    U = np.zeros((n_out, n_in), dtype=np.float32)
    for o in range(n_out):
        src = (o + 0.5) * scale - 0.5
        src = max(src, 0.0)
        i0 = min(int(np.floor(src)), n_in - 1)
        i1 = min(i0 + 1, n_in - 1)
        l1 = src - i0
        U[o, i0] += 1.0 - l1
        U[o, i1] += l1
    return U


def _stage_kernel(x_ref, skip_ref, w_ref, uw_ref, ss_ref, o_ref, ys_ref, *, h, w):
    # Per grid step (one image):
    #   x_ref    : (1, h*w,   Cin_p)  f32   low-res input, channel-padded
    #   skip_ref : (1, 4*h*w, Cp)     f32   lateral feature at 2h x 2w, flat
    #   w_ref    : (Cin_p, Cp)        bf16  1x1-conv weight (zero padded)
    #   uw_ref   : (2w, w)            f32   exact bilinear-x2 width operator
    #   ss_ref   : (2, Cp)            f32   row0 = BN scale, row1 = BN shift
    #                                       (conv bias already folded in)
    #   o_ref    : (1, 4*h*w, Cp)     f32
    #   ys_ref   : (h*w, Cp)          f32   scratch: conv output
    w2 = 2 * w
    scale = ss_ref[0:1, :]          # (1, Cp)
    shift = ss_ref[1:2, :]          # (1, Cp)

    # 1x1 conv over the whole low-res image: one well-shaped bf16 MXU matmul,
    # f32 accumulation.
    ys_ref[...] = jnp.dot(x_ref[0].astype(jnp.bfloat16), w_ref[...],
                          preferred_element_type=jnp.float32)

    uw = uw_ref[...]                # (2w, w)

    def emit(r, up):
        # Output image row r == flat rows [r*2w, (r+1)*2w); fused epilogue:
        #   (skip + up) * scale + shift   (eval-mode BN affine, f32 VPU path)
        sl = slice(r * w2, (r + 1) * w2)
        o_ref[0, sl, :] = ((skip_ref[0, sl, :] + up) * scale + shift).astype(o_ref.dtype)

    # Separable x2 bilinear upsample (align_corners=False):
    #   width  : cur = Uw @ y_row                      (tiny matmul)
    #   height : out[2i]   = 0.25*t[i-1] + 0.75*t[i]   (edge-clamped blend)
    #            out[2i+1] = 0.75*t[i]   + 0.25*t[i+1]
    # TODO(synk): for production spatial sizes, replace this static per-row
    # loop with a row-block grid axis (+ vmem_limit_bytes sizing) so blocks
    # stay within VMEM and the loop does not unroll over h.
    prev = None
    for i in range(h):
        yrow = ys_ref[i * w:(i + 1) * w, :]                               # (w, Cp)
        cur = jnp.dot(uw, yrow, preferred_element_type=jnp.float32)       # (2w, Cp)
        if i == 0:
            prev = cur                                  # top edge clamp
        else:
            emit(2 * i - 1, 0.75 * prev + 0.25 * cur)   # odd row of previous pair
        emit(2 * i, 0.25 * prev + 0.75 * cur)           # even row of this pair
        prev = cur
    emit(2 * h - 1, prev)                               # bottom edge clamp


def _decoder_stage_flat(x_flat, skip_flat, w_pad, uw, ss, h, w):
    """One LastDecoder stage on flattened channel-last (padded) tensors.

    x_flat   : (N, h*w,   Cin_p) f32
    skip_flat: (N, 4*h*w, Cp)    f32
    returns  : (N, 4*h*w, Cp)    f32
    """
    N, hw, cin_p = x_flat.shape
    _, hw4, cp = skip_flat.shape

    kernel = functools.partial(_stage_kernel, h=h, w=w)

    flops = (2 * N * hw * cin_p * cp          # 1x1 conv
             + 2 * N * h * (2 * w) * w * cp   # width upsample matmuls
             + 8 * N * hw4 * cp)              # blend + epilogue FMAs
    bytes_accessed = (4 * (x_flat.size + skip_flat.size + N * hw4 * cp)
                      + 2 * w_pad.size + 4 * (uw.size + ss.size))

    return pl.pallas_call(
        kernel,
        out_shape=jax.ShapeDtypeStruct((N, hw4, cp), jnp.float32),
        grid_spec=pltpu.PrefetchScalarGridSpec(
            num_scalar_prefetch=0,
            grid=(N,),
            in_specs=[
                pl.BlockSpec((1, hw, cin_p), lambda n: (n, 0, 0)),
                pl.BlockSpec((1, hw4, cp), lambda n: (n, 0, 0)),
                pl.BlockSpec((cin_p, cp), lambda n: (0, 0)),
                pl.BlockSpec((2 * w, w), lambda n: (0, 0)),
                pl.BlockSpec((2, cp), lambda n: (0, 0)),
            ],
            out_specs=pl.BlockSpec((1, hw4, cp), lambda n: (n, 0, 0)),
            scratch_shapes=[pltpu.VMEM((hw, cp), jnp.float32)],
        ),
        compiler_params=pltpu.CompilerParams(
            dimension_semantics=("parallel",)),
        cost_estimate=pl.CostEstimate(flops=int(flops), transcendentals=0,
                                      bytes_accessed=int(bytes_accessed)),
    )(x_flat, skip_flat, w_pad, uw, ss)


# ---------------- layout / parameter plumbing (plain JAX, boundary only) ----
def _to_flat_nhwc(x_nchw, c_pad):
    N, C, H, W = x_nchw.shape
    xf = jnp.transpose(x_nchw, (0, 2, 3, 1)).reshape(N, H * W, C)
    if c_pad > C:
        xf = jnp.pad(xf, ((0, 0), (0, 0), (0, c_pad - C)))
    return xf


def _from_flat_nhwc(x_flat, c, H, W):
    N = x_flat.shape[0]
    return jnp.transpose(x_flat[:, :, :c].reshape(N, H, W, c), (0, 3, 1, 2))


def _prep_affine(wmat, b, scale, shift):
    """Pad the 1x1-conv weight to (Cin_p, Cp) bf16 and pack the folded BN
    affine as a single (2, Cp) operand (row0 scale, row1 shift+scale*b)."""
    cin, cout = wmat.shape
    cin_p, cp = _round_up(cin, 128), _round_up(cout, 128)
    w_pad = jnp.zeros((cin_p, cp), jnp.float32).at[:cin, :cout].set(wmat)
    w_pad = w_pad.astype(jnp.bfloat16)
    # Bilinear rows sum to 1 => Upsample(conv(x)+b) == Upsample(conv(x)) + b,
    # so the conv bias folds into the BN shift exactly.
    shift_f = shift + scale * b
    scale_p = jnp.zeros((cp,), jnp.float32).at[:cout].set(scale)
    shift_p = jnp.zeros((cp,), jnp.float32).at[:cout].set(shift_f)
    return w_pad, jnp.stack([scale_p, shift_p], axis=0)


def init_params(key, dims=(96, 192, 352, 512), eps=1e-5):
    """Deterministic synthetic params: 1x1-conv (w, b) + folded eval-mode
    BatchNorm (scale, shift) per stage."""
    io = [(dims[3], dims[2]), (dims[2], dims[1]), (dims[1], dims[0])]
    params = []
    for cin, cout in io:
        key, k1, k2, k3, k4, k5, k6 = jax.random.split(key, 7)
        w = jax.random.normal(k1, (cin, cout), jnp.float32) * 0.02
        b = jax.random.normal(k2, (cout,), jnp.float32) * 0.02
        gamma = 1.0 + 0.1 * jax.random.normal(k3, (cout,), jnp.float32)
        beta = 0.1 * jax.random.normal(k4, (cout,), jnp.float32)
        mean = 0.1 * jax.random.normal(k5, (cout,), jnp.float32)
        var = jax.random.uniform(k6, (cout,), jnp.float32, minval=0.5, maxval=1.5)
        scale = gamma / jnp.sqrt(var + eps)      # BatchNorm2d eval-mode fold
        shift = beta - mean * scale
        params.append((w, b, scale, shift))
    return params


def last_decoder_forward(feats, params):
    """feats = (c2, c3, c4, c5) in NCHW; returns (c2', c3', c4', c5) in NCHW."""
    c2, c3, c4, c5 = feats
    skips = [c4, c3, c2]

    N, cin, h, w_sp = c5.shape
    x_flat = _to_flat_nhwc(c5, _round_up(cin, 128))       # chain stays NHWC-flat

    staged = []
    for skip, (wmat, b, scale, shift) in zip(skips, params):
        cout, H, W = skip.shape[1], skip.shape[2], skip.shape[3]
        cp = _round_up(cout, 128)
        skip_flat = _to_flat_nhwc(skip, cp)
        w_pad, ss = _prep_affine(wmat, b, scale, shift)
        uw = jnp.asarray(_bilinear_up2_matrix(w_sp))      # (2w, w)
        out_flat = _decoder_stage_flat(x_flat, skip_flat, w_pad, uw, ss, h, w_sp)
        staged.append((out_flat, cout, H, W))
        # the padded, channel-last, flat output feeds the next stage directly
        x_flat, h, w_sp = out_flat, H, W

    c4o = _from_flat_nhwc(*staged[0])
    c3o = _from_flat_nhwc(*staged[1])
    c2o = _from_flat_nhwc(*staged[2])
    return (c2o, c3o, c4o, c5)


# ---- plain-JAX reference (f32, separable upsample), used only for checking ----
def _ref_stage(x_small, skip, w, b, scale, shift):
    N, Cin, h, wsp = x_small.shape
    y = jnp.einsum("nchw,cd->ndhw", x_small, w) + b[None, :, None, None]
    Uh = jnp.asarray(_bilinear_up2_matrix(h))
    Uw = jnp.asarray(_bilinear_up2_matrix(wsp))
    up = jnp.einsum("oh,ndhw->ndow", Uh, y)
    up = jnp.einsum("pw,ndow->ndop", Uw, up)
    return (skip + up) * scale[None, :, None, None] + shift[None, :, None, None]


if __name__ == "__main__":
    dims = (96, 192, 352, 512)
    N, base = 2, 16  # c2 is 16x16 -> c3 8x8 -> c4 4x4 -> c5 2x2

    key = jax.random.PRNGKey(0)
    kf, kp = jax.random.split(key)
    k2, k3, k4, k5 = jax.random.split(kf, 4)
    c2 = jax.random.normal(k2, (N, dims[0], base, base), jnp.float32)
    c3 = jax.random.normal(k3, (N, dims[1], base // 2, base // 2), jnp.float32)
    c4 = jax.random.normal(k4, (N, dims[2], base // 4, base // 4), jnp.float32)
    c5 = jax.random.normal(k5, (N, dims[3], base // 8, base // 8), jnp.float32)
    params = init_params(kp, dims)

    outs = jax.block_until_ready(last_decoder_forward((c2, c3, c4, c5), params))

    # correctness check vs plain f32 reference (kernel uses bf16 MXU operands,
    # so tolerance is set for bf16 matmul inputs with f32 accumulation).
    r4 = _ref_stage(c5, c4, *params[0])
    r3 = _ref_stage(r4, c3, *params[1])
    r2 = _ref_stage(r3, c2, *params[2])
    for got, want in zip(outs[:3], (r2, r3, r4)):
        np.testing.assert_allclose(np.asarray(got), np.asarray(want),
                                   rtol=2e-2, atol=2e-2)
    assert outs[3].shape == c5.shape

    print("KERNEL_OK")
</pallas_src>

<mosaic_0001>
module attributes {stable_mosaic.version = 11 : i64} {
  func.func @_stage_kernel(%arg0: i32, %arg1: memref<1x4x512xf32, #tpu.memory_space<vmem>>, %arg2: memref<1x16x384xf32, #tpu.memory_space<vmem>>, %arg3: memref<512x384xbf16, #tpu.memory_space<vmem>>, %arg4: memref<4x2xf32, #tpu.memory_space<vmem>>, %arg5: memref<2x384xf32, #tpu.memory_space<vmem>>, %arg6: memref<1x16x384xf32, #tpu.memory_space<vmem>>, %arg7: memref<4x384xf32, #tpu.memory_space<vmem>>) attributes {dimension_semantics = [#tpu.dimension_semantics<parallel>], iteration_bounds = array<i64: 2>, scalar_prefetch = 0 : i64, scratch_operands = 1 : i64, tpu.core_type = #tpu.core_type<tc>, window_params = [{transform_indices = @transform_0, window_bounds = array<i64: 1, 4, 512>}, {transform_indices = @transform_1, window_bounds = array<i64: 1, 16, 384>}, {pipeline_mode = #tpu.pipeline_mode<synchronous>, transform_indices = @transform_2, window_bounds = array<i64: 512, 384>}, {pipeline_mode = #tpu.pipeline_mode<synchronous>, transform_indices = @transform_3, window_bounds = array<i64: 4, 2>}, {pipeline_mode = #tpu.pipeline_mode<synchronous>, transform_indices = @transform_4, window_bounds = array<i64: 2, 384>}, {transform_indices = @transform_5, window_bounds = array<i64: 1, 16, 384>}]} {
    %c0 = arith.constant 0 : index
    %c0_0 = arith.constant 0 : index
    %0 = vector.load %arg5[%c0, %c0_0] : memref<2x384xf32, #tpu.memory_space<vmem>>, vector<1x384xf32>
    %c1 = arith.constant 1 : index
    %c0_1 = arith.constant 0 : index
    %1 = vector.load %arg5[%c1, %c0_1] : memref<2x384xf32, #tpu.memory_space<vmem>>, vector<1x384xf32>
    %c0_2 = arith.constant 0 : index
    %c0_3 = arith.constant 0 : index
    %c0_4 = arith.constant 0 : index
    %2 = vector.load %arg1[%c0_2, %c0_3, %c0_4] : memref<1x4x512xf32, #tpu.memory_space<vmem>>, vector<1x4x512xf32>
    %3 = vector.shape_cast %2 : vector<1x4x512xf32> to vector<4x512xf32>
    %4 = arith.truncf %3 : vector<4x512xf32> to vector<4x512xbf16>
    %c0_5 = arith.constant 0 : index
    %c0_6 = arith.constant 0 : index
    %5 = vector.load %arg3[%c0_5, %c0_6] : memref<512x384xbf16, #tpu.memory_space<vmem>>, vector<512x384xbf16>
    %cst = arith.constant dense<0.000000e+00> : vector<4x384xf32>
    %6 = tpu.matmul %4, %5, %cst {dimension_numbers = #tpu.dot_dimension_numbers<[1], [0], [0], [1], [0, 0, 1, 1], [], []>} : vector<4x512xbf16>, vector<512x384xbf16>, vector<4x384xf32> -> vector<4x384xf32>
    %c0_7 = arith.constant 0 : index
    %c0_8 = arith.constant 0 : index
    %7 = vector.load %arg7[%c0_7, %c0_8] : memref<4x384xf32, #tpu.memory_space<vmem>>, vector<4x384xf32>
    tpu.vector_store %arg7[%c0_7, %c0_8], %6 {strides = array<i32>} : memref<4x384xf32, #tpu.memory_space<vmem>>, vector<4x384xf32>,
    %c0_9 = arith.constant 0 : index
    %c0_10 = arith.constant 0 : index
    %8 = vector.load %arg4[%c0_9, %c0_10] : memref<4x2xf32, #tpu.memory_space<vmem>>, vector<4x2xf32>
    %c0_11 = arith.constant 0 : index
    %c0_12 = arith.constant 0 : index
    %9 = vector.load %arg7[%c0_11, %c0_12] : memref<4x384xf32, #tpu.memory_space<vmem>>, vector<2x384xf32>
    %cst_13 = arith.constant dense<0.000000e+00> : vector<4x384xf32>
    %10 = tpu.matmul %8, %9, %cst_13 {dimension_numbers = #tpu.dot_dimension_numbers<[1], [0], [0], [1], [0, 0, 1, 1], [], []>} : vector<4x2xf32>, vector<2x384xf32>, vector<4x384xf32> -> vector<4x384xf32>
    %cst_14 = arith.constant 2.500000e-01 : f32
    %11 = vector.broadcast %cst_14 : f32 to vector<4x384xf32>
    %12 = arith.mulf %11, %10 : vector<4x384xf32>
    %cst_15 = arith.constant 7.500000e-01 : f32
    %13 = vector.broadcast %cst_15 : f32 to vector<4x384xf32>
    %14 = arith.mulf %13, %10 : vector<4x384xf32>
    %15 = arith.addf %12, %14 : vector<4x384xf32>
    %c0_16 = arith.constant 0 : index
    %c0_17 = arith.constant 0 : index
    %c0_18 = arith.constant 0 : index
    %16 = vector.load %arg2[%c0_16, %c0_17, %c0_18] : memref<1x16x384xf32, #tpu.memory_space<vmem>>, vector<1x4x384xf32>
    %17 = vector.shape_cast %16 : vector<1x4x384xf32> to vector<4x384xf32>
    %18 = arith.addf %17, %15 : vector<4x384xf32>
    %19 = vector.broadcast %0 : vector<1x384xf32> to vector<4x384xf32>
    %20 = arith.mulf %18, %19 : vector<4x384xf32>
    %21 = vector.broadcast %1 : vector<1x384xf32> to vector<4x384xf32>
    %22 = arith.addf %20, %21 : vector<4x384xf32>
    %c0_19 = arith.constant 0 : index
    %c0_20 = arith.constant 0 : index
    %c0_21 = arith.constant 0 : index
    %23 = vector.load %arg6[%c0_19, %c0_20, %c0_21] : memref<1x16x384xf32, #tpu.memory_space<vmem>>, vector<1x4x384xf32>
    %24 = vector.shape_cast %23 : vector<1x4x384xf32> to vector<4x384xf32>
    %25 = vector.shape_cast %22 : vector<4x384xf32> to vector<1x4x384xf32>
    tpu.vector_store %arg6[%c0_19, %c0_20, %c0_21], %25 {strides = array<i32>} : memref<1x16x384xf32, #tpu.memory_space<vmem>>, vector<1x4x384xf32>,
    %c2 = arith.constant 2 : index
    %c0_22 = arith.constant 0 : index
    %26 = vector.load %arg7[%c2, %c0_22] : memref<4x384xf32, #tpu.memory_space<vmem>>, vector<2x384xf32>
    %cst_23 = arith.constant dense<0.000000e+00> : vector<4x384xf32>
    %27 = tpu.matmul %8, %26, %cst_23 {dimension_numbers = #tpu.dot_dimension_numbers<[1], [0], [0], [1], [0, 0, 1, 1], [], []>} : vector<4x2xf32>, vector<2x384xf32>, vector<4x384xf32> -> vector<4x384xf32>
    %cst_24 = arith.constant 7.500000e-01 : f32
    %28 = vector.broadcast %cst_24 : f32 to vector<4x384xf32>
    %29 = arith.mulf %28, %10 : vector<4x384xf32>
    %cst_25 = arith.constant 2.500000e-01 : f32
    %30 = vector.broadcast %cst_25 : f32 to vector<4x384xf32>
    %31 = arith.mulf %30, %27 : vector<4x384xf32>
    %32 = arith.addf %29, %31 : vector<4x384xf32>
    %c0_26 = arith.constant 0 : index
    %c4 = arith.constant 4 : index
    %c0_27 = arith.constant 0 : index
    %33 = vector.load %arg2[%c0_26, %c4, %c0_27] : memref<1x16x384xf32, #tpu.memory_space<vmem>>, vector<1x4x384xf32>
    %34 = vector.shape_cast %33 : vector<1x4x384xf32> to vector<4x384xf32>
    %35 = arith.addf %34, %32 : vector<4x384xf32>
    %36 = vector.broadcast %0 : vector<1x384xf32> to vector<4x384xf32>
    %37 = arith.mulf %35, %36 : vector<4x384xf32>
    %38 = vector.broadcast %1 : vector<1x384xf32> to vector<4x384xf32>
    %39 = arith.addf %37, %38 : vector<4x384xf32>
    %c0_28 = arith.constant 0 : index
    %c4_29 = arith.constant 4 : index
    %c0_30 = arith.constant 0 : index
    %40 = vector.load %arg6[%c0_28, %c4_29, %c0_30] : memref<1x16x384xf32, #tpu.memory_space<vmem>>, vector<1x4x384xf32>
    %41 = vector.shape_cast %40 : vector<1x4x384xf32> to vector<4x384xf32>
    %42 = vector.shape_cast %39 : vector<4x384xf32> to vector<1x4x384xf32>
    tpu.vector_store %arg6[%c0_28, %c4_29, %c0_30], %42 {strides = array<i32>} : memref<1x16x384xf32, #tpu.memory_space<vmem>>, vector<1x4x384xf32>,
    %cst_31 = arith.constant 2.500000e-01 : f32
    %43 = vector.broadcast %cst_31 : f32 to vector<4x384xf32>
    %44 = arith.mulf %43, %10 : vector<4x384xf32>
    %cst_32 = arith.constant 7.500000e-01 : f32
    %45 = vector.broadcast %cst_32 : f32 to vector<4x384xf32>
    %46 = arith.mulf %45, %27 : vector<4x384xf32>
    %47 = arith.addf %44, %46 : vector<4x384xf32>
    %c0_33 = arith.constant 0 : index
    %c8 = arith.constant 8 : index
    %c0_34 = arith.constant 0 : index
    %48 = vector.load %arg2[%c0_33, %c8, %c0_34] : memref<1x16x384xf32, #tpu.memory_space<vmem>>, vector<1x4x384xf32>
    %49 = vector.shape_cast %48 : vector<1x4x384xf32> to vector<4x384xf32>
    %50 = arith.addf %49, %47 : vector<4x384xf32>
    %51 = vector.broadcast %0 : vector<1x384xf32> to vector<4x384xf32>
    %52 = arith.mulf %50, %51 : vector<4x384xf32>
    %53 = vector.broadcast %1 : vector<1x384xf32> to vector<4x384xf32>
    %54 = arith.addf %52, %53 : vector<4x384xf32>
    %c0_35 = arith.constant 0 : index
    %c8_36 = arith.constant 8 : index
    %c0_37 = arith.constant 0 : index
    %55 = vector.load %arg6[%c0_35, %c8_36, %c0_37] : memref<1x16x384xf32, #tpu.memory_space<vmem>>, vector<1x4x384xf32>
    %56 = vector.shape_cast %55 : vector<1x4x384xf32> to vector<4x384xf32>
    %57 = vector.shape_cast %54 : vector<4x384xf32> to vector<1x4x384xf32>
    tpu.vector_store %arg6[%c0_35, %c8_36, %c0_37], %57 {strides = array<i32>} : memref<1x16x384xf32, #tpu.memory_space<vmem>>, vector<1x4x384xf32>,
    %c0_38 = arith.constant 0 : index
    %c12 = arith.constant 12 : index
    %c0_39 = arith.constant 0 : index
    %58 = vector.load %arg2[%c0_38, %c12, %c0_39] : memref<1x16x384xf32, #tpu.memory_space<vmem>>, vector<1x4x384xf32>
    %59 = vector.shape_cast %58 : vector<1x4x384xf32> to vector<4x384xf32>
    %60 = arith.addf %59, %27 : vector<4x384xf32>
    %61 = vector.broadcast %0 : vector<1x384xf32> to vector<4x384xf32>
    %62 = arith.mulf %60, %61 : vector<4x384xf32>
    %63 = vector.broadcast %1 : vector<1x384xf32> to vector<4x384xf32>
    %64 = arith.addf %62, %63 : vector<4x384xf32>
    %c0_40 = arith.constant 0 : index
    %c12_41 = arith.constant 12 : index
    %c0_42 = arith.constant 0 : index
    %65 = vector.load %arg6[%c0_40, %c12_41, %c0_42] : memref<1x16x384xf32, #tpu.memory_space<vmem>>, vector<1x4x384xf32>
    %66 = vector.shape_cast %65 : vector<1x4x384xf32> to vector<4x384xf32>
    %67 = vector.shape_cast %64 : vector<4x384xf32> to vector<1x4x384xf32>
    tpu.vector_store %arg6[%c0_40, %c12_41, %c0_42], %67 {strides = array<i32>} : memref<1x16x384xf32, #tpu.memory_space<vmem>>, vector<1x4x384xf32>,
    return
  }
  func.func @transform_0(%arg0: i32) -> (i32, i32, i32) {
    %c0_i32 = arith.constant 0 : i32
    %c0_i32_0 = arith.constant 0 : i32
    %c0_i32_1 = arith.constant 0 : i32
    return %arg0, %c0_i32, %c0_i32_0 : i32, i32, i32
  }
  func.func @transform_1(%arg0: i32) -> (i32, i32, i32) {
    %c0_i32 = arith.constant 0 : i32
    %c0_i32_0 = arith.constant 0 : i32
    %c0_i32_1 = arith.constant 0 : i32
    return %arg0, %c0_i32, %c0_i32_0 : i32, i32, i32
  }
  func.func @transform_2(%arg0: i32) -> (i32, i32) {
    %c0_i32 = arith.constant 0 : i32
    %c0_i32_0 = arith.constant 0 : i32
    %c0_i32_1 = arith.constant 0 : i32
    return %c0_i32, %c0_i32_0 : i32, i32
  }
  func.func @transform_3(%arg0: i32) -> (i32, i32) {
    %c0_i32 = arith.constant 0 : i32
    %c0_i32_0 = arith.constant 0 : i32
    %c0_i32_1 = arith.constant 0 : i32
    return %c0_i32, %c0_i32_0 : i32, i32
  }
  func.func @transform_4(%arg0: i32) -> (i32, i32) {
    %c0_i32 = arith.constant 0 : i32
    %c0_i32_0 = arith.constant 0 : i32
    %c0_i32_1 = arith.constant 0 : i32
    return %c0_i32, %c0_i32_0 : i32, i32
  }
  func.func @transform_5(%arg0: i32) -> (i32, i32, i32) {
    %c0_i32 = arith.constant 0 : i32
    %c0_i32_0 = arith.constant 0 : i32
    %c0_i32_1 = arith.constant 0 : i32
    return %arg0, %c0_i32, %c0_i32_0 : i32, i32, i32
  }
}

</mosaic_0001>

<llo_original>
// kernel: tpu_custom_call.1
$region0: #{tpu_custom_call.1}
  #allocation0 [shape = 'u32[]', space=smem, size = 0x4, offset = 0x4, fixed_abs, tag = 'smem constant byte address 0x4 - core index']
  #allocation1 [shape = 'u32[144,128]{1,0:T(1,128)}', space=vmem, size = 0x12000, scoped, tag = 'internal scratch']
  #allocation2 [shape = 'f32[4,384]{1,0:T(4,128)}', space=vmem, size = 0x1800, scoped, tag = 'scratch operand']
  %s0 = inlined_call_operand.hbm [shape: f32[2,4,512], index: 0, kind: input, shape index: {}]
  %s1 = inlined_call_operand.hbm [shape: f32[2,16,384], index: 1, kind: input, shape index: {}]
  %s2 = inlined_call_operand.hbm [shape: bf16[512,384], index: 2, kind: input, shape index: {}]
  %s3 = inlined_call_operand.vmem [shape: f32[4,2], index: 3, kind: input, shape index: {}]
  %s4 = inlined_call_operand.vmem [shape: f32[2,384], index: 4, kind: input, shape index: {}]
  %s5 = inlined_call_operand.hbm [shape: f32[2,16,384], index: 5, kind: output, shape index: {}]
  %s6 = sld [smem:[#allocation0]]
  $region65: #{tpu_custom_call.1} parent=0
    _
  %s8 = ssub.s32 1, %s6
  %s9 = scalar_select 0, %s8, %s6
  $region1: #{tpu_custom_call.1} parent=0
    #allocation3 [shape = 'u8[16384]{0}', space=vmem, size = 0x4000, scoped, tag = 'input window, operand 0']
    #allocation4 [shape = 's32[2]{0}', space=sflag, size = 0x8, scoped, tag = 'scoped memory for tpu_custom_call.1']
    #allocation5 [shape = 's32[2]{0}', space=sflag, size = 0x8, scoped, tag = 'scoped memory for tpu_custom_call.1']
    #allocation6 [shape = 'u8[49152]{0}', space=vmem, size = 0xc000, scoped, tag = 'input window, operand 1']
    #allocation7 [shape = 's32[2]{0}', space=sflag, size = 0x8, scoped, tag = 'scoped memory for tpu_custom_call.1']
    #allocation8 [shape = 'u8[393216]{0}', space=vmem, size = 0x60000, scoped, tag = 'input window, operand 2, single buffered']
    #allocation9 [shape = 'u8[49152]{0}', space=vmem, size = 0xc000, scoped, tag = 'output window, operand 0']
    %10 = vsyncpa [#allocation4], 0
    %s11 = scalar_lea.sflag [#allocation4], 1
    %12 = vsyncpa %s11, 0
    %13 = vsyncpa [#allocation7], 0
    %s14 = scalar_lea.sflag [#allocation7], 1
    %15 = vsyncpa %s14, 0
    %16 = vsyncpa [#allocation5], 0
    %s17 = scalar_lea.sflag [#allocation5], 1
    %18 = vsyncpa %s17, 0
    loop: start=0, step=1, limit=4
    $region2: #{tpu_custom_call.1} parent=1 // loop_pre_header
      _
    $region3: #{tpu_custom_call.1} parent=1 // loop_header
      %s20 = sphi 0, %s24
      %p21 = scmp.ge.s32.totalorder %s20, 4
      %s30 = sphi 0, %s32
      %s33 = sphi 0, %s30
      %s34 = sphi 0, %s33
      %s50 = sphi 0, %s34
      %s56 = sphi 0, %s58
      %s59 = sphi 0, %s56
      %s60 = sphi 0, %s59
      %s76 = sphi 0, %s60
      %s80 = sphi 0, %s80
      %s82 = sphi 0, %s80
      %s83 = sphi 0, %s82
      %s97 = sphi 0, %s83
      %s101 = sphi 0, %s101
      %s103 = sphi 0, %s101
      %s104 = sphi 0, %s103
      %s118 = sphi 0, %s104
      %s122 = sphi 0, %s122
      %s124 = sphi 0, %s122
      %s125 = sphi 0, %s124
      %s139 = sphi 0, %s125
      %s145 = sphi 0, %s147
      %s148 = sphi 0, %s145
      %s149 = sphi 0, %s148
      %s165 = sphi 0, %s149
    $region4: #{tpu_custom_call.1} parent=1 // loop_header_branch
      %23 = sbr.rel (%p21) target = $region8
    $region5: #{tpu_custom_call.1} parent=1 // loop_body
      %s25 = ssub.s32 %s20, 1
      %s26 = ssub.s32 %s20, 2
      %s27 = sadd.s32 %s20, 1
      %s28 = ssub.s32 %s20, %s27
      %p29 = scmp.eq.s32.totalorder %s28, 0
      %s31 = sadd.s32 %s30, 1
      %s32 = scalar_select %p29, %s30, %s31
      %p35 = pneg %p29
      %p36 = scmp.eq.s32.totalorder %s20, 1
      %p37 = por %p35, %p36
      %p38 = scmp.ne.s32.totalorder %s30, %s33
      %p39 = scmp.eq.s32.totalorder %s20, 0
      %p40 = por %p38, %p39
      %p41 = scmp.ne.s32.totalorder %s30, %s33
      %p42 = scmp.eq.s32.totalorder %s25, 1
      %p43 = por %p41, %p42
      %p44 = scmp.ne.s32.totalorder %s33, %s34
      %p45 = scmp.eq.s32.totalorder %s25, 0
      %p46 = por %p44, %p45
      %p47 = scmp.ne.s32.totalorder %s33, %s34
      %p48 = scmp.eq.s32.totalorder %s26, 1
      %p49 = por %p47, %p48
      %p51 = scmp.ne.s32.totalorder %s34, %s50
      %p52 = scmp.eq.s32.totalorder %s26, 0
      %p53 = por %p51, %p52
      %s54 = ssub.s32 %s20, %s27
      %p55 = scmp.eq.s32.totalorder %s54, 0
      %s57 = sadd.s32 %s56, 1
      %s58 = scalar_select %p55, %s56, %s57
      %p61 = pneg %p55
      %p62 = scmp.eq.s32.totalorder %s20, 1
      %p63 = por %p61, %p62
      %p64 = scmp.ne.s32.totalorder %s56, %s59
      %p65 = scmp.eq.s32.totalorder %s20, 0
      %p66 = por %p64, %p65
      %p67 = scmp.ne.s32.totalorder %s56, %s59
      %p68 = scmp.eq.s32.totalorder %s25, 1
      %p69 = por %p67, %p68
      %p70 = scmp.ne.s32.totalorder %s59, %s60
      %p71 = scmp.eq.s32.totalorder %s25, 0
      %p72 = por %p70, %p71
      %p73 = scmp.ne.s32.totalorder %s59, %s60
      %p74 = scmp.eq.s32.totalorder %s26, 1
      %p75 = por %p73, %p74
      %p77 = scmp.ne.s32.totalorder %s60, %s76
      %p78 = scmp.eq.s32.totalorder %s26, 0
      %p79 = por %p77, %p78
      %s81 = sadd.s32 %s80, 1
      %p84 = scmp.eq.s32.totalorder %s20, 1
      %p85 = scmp.ne.s32.totalorder %s80, %s82
      %p86 = scmp.eq.s32.totalorder %s20, 0
      %p87 = por %p85, %p86
      %p88 = scmp.ne.s32.totalorder %s80, %s82
      %p89 = scmp.eq.s32.totalorder %s25, 1
      %p90 = por %p88, %p89
      %p91 = scmp.ne.s32.totalorder %s82, %s83
      %p92 = scmp.eq.s32.totalorder %s25, 0
      %p93 = por %p91, %p92
      %p94 = scmp.ne.s32.totalorder %s82, %s83
      %p95 = scmp.eq.s32.totalorder %s26, 1
      %p96 = por %p94, %p95
      %p98 = scmp.ne.s32.totalorder %s83, %s97
      %p99 = scmp.eq.s32.totalorder %s26, 0
      %p100 = por %p98, %p99
      %s102 = sadd.s32 %s101, 1
      %p105 = scmp.eq.s32.totalorder %s20, 1
      %p106 = scmp.ne.s32.totalorder %s101, %s103
      %p107 = scmp.eq.s32.totalorder %s20, 0
      %p108 = por %p106, %p107
      %p109 = scmp.ne.s32.totalorder %s101, %s103
      %p110 = scmp.eq.s32.totalorder %s25, 1
      %p111 = por %p109, %p110
      %p112 = scmp.ne.s32.totalorder %s103, %s104
      %p113 = scmp.eq.s32.totalorder %s25, 0
      %p114 = por %p112, %p113
      %p115 = scmp.ne.s32.totalorder %s103, %s104
      %p116 = scmp.eq.s32.totalorder %s26, 1
      %p117 = por %p115, %p116
      %p119 = scmp.ne.s32.totalorder %s104, %s118
      %p120 = scmp.eq.s32.totalorder %s26, 0
      %p121 = por %p119, %p120
      %s123 = sadd.s32 %s122, 1
      %p126 = scmp.eq.s32.totalorder %s20, 1
      %p127 = scmp.ne.s32.totalorder %s122, %s124
      %p128 = scmp.eq.s32.totalorder %s20, 0
      %p129 = por %p127, %p128
      %p130 = scmp.ne.s32.totalorder %s122, %s124
      %p131 = scmp.eq.s32.totalorder %s25, 1
      %p132 = por %p130, %p131
      %p133 = scmp.ne.s32.totalorder %s124, %s125
      %p134 = scmp.eq.s32.totalorder %s25, 0
      %p135 = por %p133, %p134
      %p136 = scmp.ne.s32.totalorder %s124, %s125
      %p137 = scmp.eq.s32.totalorder %s26, 1
      %p138 = por %p136, %p137
      %p140 = scmp.ne.s32.totalorder %s125, %s139
      %p141 = scmp.eq.s32.totalorder %s26, 0
      %p142 = por %p140, %p141
      %s143 = ssub.s32 %s20, %s27
      %p144 = scmp.eq.s32.totalorder %s143, 0
      %s146 = sadd.s32 %s145, 1
      %s147 = scalar_select %p144, %s145, %s146
      %p150 = pneg %p144
      %p151 = scmp.eq.s32.totalorder %s20, 1
      %p152 = por %p150, %p151
      %p153 = scmp.ne.s32.totalorder %s145, %s148
      %p154 = scmp.eq.s32.totalorder %s20, 0
      %p155 = por %p153, %p154
      %p156 = scmp.ne.s32.totalorder %s145, %s148
      %p157 = scmp.eq.s32.totalorder %s25, 1
      %p158 = por %p156, %p157
      %p159 = scmp.ne.s32.totalorder %s148, %s149
      %p160 = scmp.eq.s32.totalorder %s25, 0
      %p161 = por %p159, %p160
      %p162 = scmp.ne.s32.totalorder %s148, %s149
      %p163 = scmp.eq.s32.totalorder %s26, 1
      %p164 = por %p162, %p163
      %p166 = scmp.ne.s32.totalorder %s149, %s165
      %p167 = scmp.eq.s32.totalorder %s26, 0
      %p168 = por %p166, %p167
      %p169 = scmp.le.s32.totalorder 1, %s20
      %p170 = scmp.lt.s32.totalorder %s20, 3
      %p171 = pnand %p169, %p170
      %p172 = pneg %p171
      // Predicated region
      $region9: #{tpu_custom_call.1} parent=5 // pred_check
        _
      $region10: #{tpu_custom_call.1} parent=5 // pred_check_branch
        %174 = sbr.rel (%p171) target = $region12
      $region11: #{tpu_custom_call.1} parent=5 // pred_region
        %s175 = ssub.s32 %s20, 1
        // Predicated region
        $region13: #{tpu_custom_call.1} parent=11 // pred_check
          %p176 = pneg %p93
        $region14: #{tpu_custom_call.1} parent=11 // pred_check_branch
          %178 = sbr.rel (%p176) target = $region16
        $region15: #{tpu_custom_call.1} parent=11 // pred_region
          %s180 = ssub.s32 12288, 12288
          %181 = vsyncadd [#allocation7], %s180
          %s182 = sshll.u32 [#allocation8], 4
          %s183 = int_to_ptr.vmem [resolvable:$true] %s182
          %188 = dma.hbm_to_vmem [thread:$0]  %s2, 12288, %s183, [#allocation7], 192, 192, 12
        $region16: #{tpu_custom_call.1} parent=11 // pred_fallthru
          _
        // Predicated region
        $region17: #{tpu_custom_call.1} parent=11 // pred_check
          %p189 = pneg %p114
        $region18: #{tpu_custom_call.1} parent=11 // pred_check_branch
          %191 = sbr.rel (%p189) target = $region20
        $region19: #{tpu_custom_call.1} parent=11 // pred_region
          _
        $region20: #{tpu_custom_call.1} parent=11 // pred_fallthru
          _
        // Predicated region
        $region21: #{tpu_custom_call.1} parent=11 // pred_check
          %p192 = pneg %p135
        $region22: #{tpu_custom_call.1} parent=11 // pred_check_branch
          %194 = sbr.rel (%p192) target = $region24
        $region23: #{tpu_custom_call.1} parent=11 // pred_region
          _
        $region24: #{tpu_custom_call.1} parent=11 // pred_fallthru
          _
      $region12: #{tpu_custom_call.1} parent=5 // pred_fallthru
        _
      %p195 = scmp.lt.s32.totalorder %s20, 2
      // Predicated region
      $region25: #{tpu_custom_call.1} parent=5 // pred_check
        %p196 = pneg %p195
      $region26: #{tpu_custom_call.1} parent=5 // pred_check_branch
        %198 = sbr.rel (%p196) target = $region28
      $region27: #{tpu_custom_call.1} parent=5 // pred_region
        // Predicated region
        $region29: #{tpu_custom_call.1} parent=27 // pred_check
          %p199 = pneg %p40
        $region30: #{tpu_custom_call.1} parent=27 // pred_check_branch
          %201 = sbr.rel (%p199) target = $region32
        $region31: #{tpu_custom_call.1} parent=27 // pred_region
          %s202 = sand.u32 %s30, 1
          %s203 = scalar_lea.sflag [#allocation4], %s202
          %s204 = sand.u32 %s30, 1
          %s205 = smul.addr %s204, 16
          %s206 = scalar_lea.vmem [#allocation3], %s205
          %s208 = ssub.s32 256, 256
          %209 = vsyncadd %s203, %s208
          %s210 = smul.addr %s20, 4
          %s211 = smul.addr %s210, 64
          %s212 = scalar_lea.hbm %s0, %s211
          %s214 = sshll.u32 %s206, 4
          %s215 = int_to_ptr.vmem [resolvable:$true] %s214
          %217 = dma.hbm_to_vmem [thread:$0]  %s212, 256, %s215, %s203
        $region32: #{tpu_custom_call.1} parent=27 // pred_fallthru
          _
        // Predicated region
        $region33: #{tpu_custom_call.1} parent=27 // pred_check
          %p218 = pneg %p66
        $region34: #{tpu_custom_call.1} parent=27 // pred_check_branch
          %220 = sbr.rel (%p218) target = $region36
        $region35: #{tpu_custom_call.1} parent=27 // pred_region
          %s221 = sand.u32 %s20, 1
          %s222 = scalar_lea.sflag [#allocation7], %s221
          %s223 = sand.u32 %s56, 1
          %s224 = smul.addr %s223, 48
          %s225 = scalar_lea.vmem [#allocation6], %s224
          %s227 = ssub.s32 768, 768
          %228 = vsyncadd %s222, %s227
          %s229 = smul.addr %s20, 6
          %s230 = smul.addr %s229, 128
          %s231 = scalar_lea.hbm %s1, %s230
          %s232 = sshll.u32 %s225, 4
          %s233 = int_to_ptr.vmem [resolvable:$true] %s232
          %238 = dma.hbm_to_vmem [thread:$0]  %s231, 768, %s233, %s222, 384, 384, 24
        $region36: #{tpu_custom_call.1} parent=27 // pred_fallthru
          _
      $region28: #{tpu_custom_call.1} parent=5 // pred_fallthru
        _
      %p239 = scmp.le.s32.totalorder 1, %s20
      %p240 = scmp.lt.s32.totalorder %s20, 3
      %p241 = pnand %p239, %p240
      %p242 = pneg %p241
      // Predicated region
      $region37: #{tpu_custom_call.1} parent=5 // pred_check
        _
      $region38: #{tpu_custom_call.1} parent=5 // pred_check_branch
        %244 = sbr.rel (%p241) target = $region40
      $region39: #{tpu_custom_call.1} parent=5 // pred_region
        %s245 = ssub.s32 %s20, 1
        %s246 = sand.u32 %s33, 1
        %s247 = scalar_lea.sflag [#allocation4], %s246
        %s248 = sand.u32 %s33, 1
        %s249 = smul.addr %s248, 16
        %s250 = scalar_lea.vmem [#allocation3], %s249
        // Predicated region
        $region41: #{tpu_custom_call.1} parent=39 // pred_check
          %p251 = pneg %p46
        $region42: #{tpu_custom_call.1} parent=39 // pred_check_branch
          %253 = sbr.rel (%p251) target = $region44
        $region43: #{tpu_custom_call.1} parent=39 // pred_region
          %254 = dma.done %s247, 256
        $region44: #{tpu_custom_call.1} parent=39 // pred_fallthru
          _
        %s255 = sand.u32 %s25, 1
        %s256 = scalar_lea.sflag [#allocation7], %s255
        %s257 = sand.u32 %s59, 1
        %s258 = smul.addr %s257, 48
        %s259 = scalar_lea.vmem [#allocation6], %s258
        // Predicated region
        $region45: #{tpu_custom_call.1} parent=39 // pred_check
          %p260 = pneg %p72
        $region46: #{tpu_custom_call.1} parent=39 // pred_check_branch
          %262 = sbr.rel (%p260) target = $region48
        $region47: #{tpu_custom_call.1} parent=39 // pred_region
          %263 = dma.done %s256, 768
        $region48: #{tpu_custom_call.1} parent=39 // pred_fallthru
          _
        // Predicated region
        $region49: #{tpu_custom_call.1} parent=39 // pred_check
          %p264 = pneg %p93
        $region50: #{tpu_custom_call.1} parent=39 // pred_check_branch
          %266 = sbr.rel (%p264) target = $region52
        $region51: #{tpu_custom_call.1} parent=39 // pred_region
          %267 = dma.done [#allocation7], 12288
        $region52: #{tpu_custom_call.1} parent=39 // pred_fallthru
          _
        %s268 = sand.u32 %s33, 1
        %s269 = scalar_lea.sflag [#allocation4], %s268
        %s270 = sand.u32 %s33, 1
        %s271 = smul.addr %s270, 16
        %s272 = scalar_lea.vmem [#allocation3], %s271
        %p273 = pneg %p46
        %p274 = pneg %p43
        %s275 = sand.u32 %s25, 1
        %s276 = scalar_lea.sflag [#allocation7], %s275
        %s277 = sand.u32 %s59, 1
        %s278 = smul.addr %s277, 48
        %s279 = scalar_lea.vmem [#allocation6], %s278
        %p280 = pneg %p72
        %p281 = pneg %p69
        %p282 = pneg %p93
        %p283 = pneg %p90
        %p284 = pneg %p114
        %p285 = pneg %p111
        %p286 = pneg %p135
        %p287 = pneg %p132
        %p288 = pneg %p161
        %p289 = pneg %p158
        %s290 = sand.u32 %s148, 1
        %s291 = scalar_lea.sflag [#allocation5], %s290
        %s292 = sand.u32 %s148, 1
        %s293 = smul.addr %s292, 48
        %s294 = scalar_lea.vmem [#allocation9], %s293
        %v296 = vld [vmem:[%s4] ss:$2 sm:$0x7]
        %s297 = scalar_lea.vmem %s4, 1
        %v298 = vld [vmem:[%s297] ss:$2 sm:$0x7]
        %v299 = vld [vmem:[%s250] sm:$0xff]
        %v300 = vld [vmem:[%s250 + $0x8] sm:$0xff]
        %v303 = vcombine.high %v299, %v299
        %v304 = vcombine.high %v300, %v300
        %v307 = vpack.c.bf16 %v299, %v299
        %v308 = vpack.c.bf16 %v303, %v303
        %v309 = vpack.c.bf16 %v300, %v300
        %v310 = vpack.c.bf16 %v304, %v304
        %v311 = vld [vmem:[#allocation8] sm:$0xff]
        %v312 = vld [vmem:[#allocation8 + $0x8] sm:$0xf]
        %v313 = vld [vmem:[#allocation8 + $0xc] sm:$0xff]
        %v314 = vld [vmem:[#allocation8 + $0x14] sm:$0xf]
        %v315 = vld [vmem:[#allocation8 + $0x18] sm:$0xff]
        %v316 = vld [vmem:[#allocation8 + $0x20] sm:$0xf]
        %v317 = vld [vmem:[#allocation8 + $0x24] sm:$0xff]
        %v318 = vld [vmem:[#allocation8 + $0x2c] sm:$0xf]
        %v319 = vld [vmem:[#allocation8 + $0x30] sm:$0xff]
        %v320 = vld [vmem:[#allocation8 + $0x38] sm:$0xf]
        %v321 = vld [vmem:[#allocation8 + $0x3c] sm:$0xff]
        %v322 = vld [vmem:[#allocation8 + $0x44] sm:$0xf]
        %v323 = vld [vmem:[#allocation8 + $0x48] sm:$0xff]
        %v324 = vld [vmem:[#allocation8 + $0x50] sm:$0xf]
        %v325 = vld [vmem:[#allocation8 + $0x54] sm:$0xff]
        %v326 = vld [vmem:[#allocation8 + $0x5c] sm:$0xf]
        %v327 = vld [vmem:[#allocation8 + $0x60] sm:$0xff]
        %v328 = vld [vmem:[#allocation8 + $0x68] sm:$0xf]
        %v329 = vld [vmem:[#allocation8 + $0x6c] sm:$0xff]
        %v330 = vld [vmem:[#allocation8 + $0x74] sm:$0xf]
        %v331 = vld [vmem:[#allocation8 + $0x78] sm:$0xff]
        %v332 = vld [vmem:[#allocation8 + $0x80] sm:$0xf]
        %v333 = vld [vmem:[#allocation8 + $0x84] sm:$0xff]
        %v334 = vld [vmem:[#allocation8 + $0x8c] sm:$0xf]
        %v335 = vld [vmem:[#allocation8 + $0x90] sm:$0xff]
        %v336 = vld [vmem:[#allocation8 + $0x98] sm:$0xf]
        %v337 = vld [vmem:[#allocation8 + $0x9c] sm:$0xff]
        %v338 = vld [vmem:[#allocation8 + $0xa4] sm:$0xf]
        %v339 = vld [vmem:[#allocation8 + $0xa8] sm:$0xff]
        %v340 = vld [vmem:[#allocation8 + $0xb0] sm:$0xf]
        %v341 = vld [vmem:[#allocation8 + $0xb4] sm:$0xff]
        %v342 = vld [vmem:[#allocation8 + $0xbc] sm:$0xf]
        %v343 = vld [vmem:[#allocation8 + $0xc0] sm:$0xff]
        %v344 = vld [vmem:[#allocation8 + $0xc8] sm:$0xf]
        %v345 = vld [vmem:[#allocation8 + $0xcc] sm:$0xff]
        %v346 = vld [vmem:[#allocation8 + $0xd4] sm:$0xf]
        %v347 = vld [vmem:[#allocation8 + $0xd8] sm:$0xff]
        %v348 = vld [vmem:[#allocation8 + $0xe0] sm:$0xf]
        %v349 = vld [vmem:[#allocation8 + $0xe4] sm:$0xff]
        %v350 = vld [vmem:[#allocation8 + $0xec] sm:$0xf]
        %v351 = vld [vmem:[#allocation8 + $0xf0] sm:$0xff]
        %v352 = vld [vmem:[#allocation8 + $0xf8] sm:$0xf]
        %v353 = vld [vmem:[#allocation8 + $0xfc] sm:$0xff]
        %v354 = vld [vmem:[#allocation8 + $0x104] sm:$0xf]
        %v355 = vld [vmem:[#allocation8 + $0x108] sm:$0xff]
        %v356 = vld [vmem:[#allocation8 + $0x110] sm:$0xf]
        %v357 = vld [vmem:[#allocation8 + $0x114] sm:$0xff]
        %v358 = vld [vmem:[#allocation8 + $0x11c] sm:$0xf]
        %v359 = vld [vmem:[#allocation8 + $0x120] sm:$0xff]
        %v360 = vld [vmem:[#allocation8 + $0x128] sm:$0xf]
        %v361 = vld [vmem:[#allocation8 + $0x12c] sm:$0xff]
        %v362 = vld [vmem:[#allocation8 + $0x134] sm:$0xf]
        %v363 = vld [vmem:[#allocation8 + $0x138] sm:$0xff]
        %v364 = vld [vmem:[#allocation8 + $0x140] sm:$0xf]
        %v365 = vld [vmem:[#allocation8 + $0x144] sm:$0xff]
        %v366 = vld [vmem:[#allocation8 + $0x14c] sm:$0xf]
        %v367 = vld [vmem:[#allocation8 + $0x150] sm:$0xff]
        %v368 = vld [vmem:[#allocation8 + $0x158] sm:$0xf]
        %v369 = vld [vmem:[#allocation8 + $0x15c] sm:$0xff]
        %v370 = vld [vmem:[#allocation8 + $0x164] sm:$0xf]
        %v371 = vld [vmem:[#allocation8 + $0x168] sm:$0xff]
        %v372 = vld [vmem:[#allocation8 + $0x170] sm:$0xf]
        %v373 = vld [vmem:[#allocation8 + $0x174] sm:$0xff]
        %v374 = vld [vmem:[#allocation8 + $0x17c] sm:$0xf]
        %v375 = vld [vmem:[#allocation8 + $0x180] sm:$0xff]
        %v376 = vld [vmem:[#allocation8 + $0x188] sm:$0xf]
        %v377 = vld [vmem:[#allocation8 + $0x18c] sm:$0xff]
        %v378 = vld [vmem:[#allocation8 + $0x194] sm:$0xf]
        %v379 = vld [vmem:[#allocation8 + $0x198] sm:$0xff]
        %v380 = vld [vmem:[#allocation8 + $0x1a0] sm:$0xf]
        %v381 = vld [vmem:[#allocation8 + $0x1a4] sm:$0xff]
        %v382 = vld [vmem:[#allocation8 + $0x1ac] sm:$0xf]
        %v383 = vld [vmem:[#allocation8 + $0x1b0] sm:$0xff]
        %v384 = vld [vmem:[#allocation8 + $0x1b8] sm:$0xf]
        %v385 = vld [vmem:[#allocation8 + $0x1bc] sm:$0xff]
        %v386 = vld [vmem:[#allocation8 + $0x1c4] sm:$0xf]
        %v387 = vld [vmem:[#allocation8 + $0x1c8] sm:$0xff]
        %v388 = vld [vmem:[#allocation8 + $0x1d0] sm:$0xf]
        %v389 = vld [vmem:[#allocation8 + $0x1d4] sm:$0xff]
        %v390 = vld [vmem:[#allocation8 + $0x1dc] sm:$0xf]
        %v391 = vld [vmem:[#allocation8 + $0x1e0] sm:$0xff]
        %v392 = vld [vmem:[#allocation8 + $0x1e8] sm:$0xf]
        %v393 = vld [vmem:[#allocation8 + $0x1ec] sm:$0xff]
        %v394 = vld [vmem:[#allocation8 + $0x1f4] sm:$0xf]
        %v395 = vld [vmem:[#allocation8 + $0x1f8] sm:$0xff]
        %v396 = vld [vmem:[#allocation8 + $0x200] sm:$0xf]
        %v397 = vld [vmem:[#allocation8 + $0x204] sm:$0xff]
        %v398 = vld [vmem:[#allocation8 + $0x20c] sm:$0xf]
        %v399 = vld [vmem:[#allocation8 + $0x210] sm:$0xff]
        %v400 = vld [vmem:[#allocation8 + $0x218] sm:$0xf]
        %v401 = vld [vmem:[#allocation8 + $0x21c] sm:$0xff]
        %v402 = vld [vmem:[#allocation8 + $0x224] sm:$0xf]
        %v403 = vld [vmem:[#allocation8 + $0x228] sm:$0xff]
        %v404 = vld [vmem:[#allocation8 + $0x230] sm:$0xf]
        %v405 = vld [vmem:[#allocation8 + $0x234] sm:$0xff]
        %v406 = vld [vmem:[#allocation8 + $0x23c] sm:$0xf]
        %v407 = vld [vmem:[#allocation8 + $0x240] sm:$0xff]
        %v408 = vld [vmem:[#allocation8 + $0x248] sm:$0xf]
        %v409 = vld [vmem:[#allocation8 + $0x24c] sm:$0xff]
        %v410 = vld [vmem:[#allocation8 + $0x254] sm:$0xf]
        %v411 = vld [vmem:[#allocation8 + $0x258] sm:$0xff]
        %v412 = vld [vmem:[#allocation8 + $0x260] sm:$0xf]
        %v413 = vld [vmem:[#allocation8 + $0x264] sm:$0xff]
        %v414 = vld [vmem:[#allocation8 + $0x26c] sm:$0xf]
        %v415 = vld [vmem:[#allocation8 + $0x270] sm:$0xff]
        %v416 = vld [vmem:[#allocation8 + $0x278] sm:$0xf]
        %v417 = vld [vmem:[#allocation8 + $0x27c] sm:$0xff]
        %v418 = vld [vmem:[#allocation8 + $0x284] sm:$0xf]
        %v419 = vld [vmem:[#allocation8 + $0x288] sm:$0xff]
        %v420 = vld [vmem:[#allocation8 + $0x290] sm:$0xf]
        %v421 = vld [vmem:[#allocation8 + $0x294] sm:$0xff]
        %v422 = vld [vmem:[#allocation8 + $0x29c] sm:$0xf]
        %v423 = vld [vmem:[#allocation8 + $0x2a0] sm:$0xff]
        %v424 = vld [vmem:[#allocation8 + $0x2a8] sm:$0xf]
        %v425 = vld [vmem:[#allocation8 + $0x2ac] sm:$0xff]
        %v426 = vld [vmem:[#allocation8 + $0x2b4] sm:$0xf]
        %v427 = vld [vmem:[#allocation8 + $0x2b8] sm:$0xff]
        %v428 = vld [vmem:[#allocation8 + $0x2c0] sm:$0xf]
        %v429 = vld [vmem:[#allocation8 + $0x2c4] sm:$0xff]
        %v430 = vld [vmem:[#allocation8 + $0x2cc] sm:$0xf]
        %v431 = vld [vmem:[#allocation8 + $0x2d0] sm:$0xff]
        %v432 = vld [vmem:[#allocation8 + $0x2d8] sm:$0xf]
        %v433 = vld [vmem:[#allocation8 + $0x2dc] sm:$0xff]
        %v434 = vld [vmem:[#allocation8 + $0x2e4] sm:$0xf]
        %v435 = vld [vmem:[#allocation8 + $0x2e8] sm:$0xff]
        %v436 = vld [vmem:[#allocation8 + $0x2f0] sm:$0xf]
        %v437 = vld [vmem:[#allocation8 + $0x2f4] sm:$0xff]
        %v438 = vld [vmem:[#allocation8 + $0x2fc] sm:$0xf]
        %v567 = vunpack.c.l.b16 %v311
        %v568 = vunpack.c.h.b16 %v311
        %v569 = vunpack.c.l.b16 %v312
        %v570 = vunpack.c.l.b16 %v313
        %v571 = vunpack.c.h.b16 %v313
        %v572 = vunpack.c.l.b16 %v314
        %v573 = vunpack.c.l.b16 %v315
        %v574 = vunpack.c.h.b16 %v315
        %v575 = vunpack.c.l.b16 %v316
        %v576 = vunpack.c.l.b16 %v317
        %v577 = vunpack.c.h.b16 %v317
        %v578 = vunpack.c.l.b16 %v318
        %v579 = vunpack.c.l.b16 %v319
        %v580 = vunpack.c.h.b16 %v319
        %v581 = vunpack.c.l.b16 %v320
        %v582 = vunpack.c.l.b16 %v321
        %v583 = vunpack.c.h.b16 %v321
        %v584 = vunpack.c.l.b16 %v322
        %v585 = vunpack.c.l.b16 %v323
        %v586 = vunpack.c.h.b16 %v323
        %v587 = vunpack.c.l.b16 %v324
        %v588 = vunpack.c.l.b16 %v325
        %v589 = vunpack.c.h.b16 %v325
        %v590 = vunpack.c.l.b16 %v326
        %v591 = vunpack.c.l.b16 %v327
        %v592 = vunpack.c.h.b16 %v327
        %v593 = vunpack.c.l.b16 %v328
        %v594 = vunpack.c.l.b16 %v329
        %v595 = vunpack.c.h.b16 %v329
        %v596 = vunpack.c.l.b16 %v330
        %v597 = vunpack.c.l.b16 %v331
        %v598 = vunpack.c.h.b16 %v331
        %v599 = vunpack.c.l.b16 %v332
        %v600 = vunpack.c.l.b16 %v333
        %v601 = vunpack.c.h.b16 %v333
        %v602 = vunpack.c.l.b16 %v334
        %v603 = vunpack.c.l.b16 %v335
        %v604 = vunpack.c.h.b16 %v335
        %v605 = vunpack.c.l.b16 %v336
        %v606 = vunpack.c.l.b16 %v337
        %v607 = vunpack.c.h.b16 %v337
        %v608 = vunpack.c.l.b16 %v338
        %v609 = vunpack.c.l.b16 %v339
        %v610 = vunpack.c.h.b16 %v339
        %v611 = vunpack.c.l.b16 %v340
        %v612 = vunpack.c.l.b16 %v341
        %v613 = vunpack.c.h.b16 %v341
        %v614 = vunpack.c.l.b16 %v342
        %v615 = vunpack.c.l.b16 %v343
        %v616 = vunpack.c.h.b16 %v343
        %v617 = vunpack.c.l.b16 %v344
        %v618 = vunpack.c.l.b16 %v345
        %v619 = vunpack.c.h.b16 %v345
        %v620 = vunpack.c.l.b16 %v346
        %v621 = vunpack.c.l.b16 %v347
        %v622 = vunpack.c.h.b16 %v347
        %v623 = vunpack.c.l.b16 %v348
        %v624 = vunpack.c.l.b16 %v349
        %v625 = vunpack.c.h.b16 %v349
        %v626 = vunpack.c.l.b16 %v350
        %v627 = vunpack.c.l.b16 %v351
        %v628 = vunpack.c.h.b16 %v351
        %v629 = vunpack.c.l.b16 %v352
        %v630 = vunpack.c.l.b16 %v353
        %v631 = vunpack.c.h.b16 %v353
        %v632 = vunpack.c.l.b16 %v354
        %v633 = vunpack.c.l.b16 %v355
        %v634 = vunpack.c.h.b16 %v355
        %v635 = vunpack.c.l.b16 %v356
        %v636 = vunpack.c.l.b16 %v357
        %v637 = vunpack.c.h.b16 %v357
        %v638 = vunpack.c.l.b16 %v358
        %v639 = vunpack.c.l.b16 %v359
        %v640 = vunpack.c.h.b16 %v359
        %v641 = vunpack.c.l.b16 %v360
        %v642 = vunpack.c.l.b16 %v361
        %v643 = vunpack.c.h.b16 %v361
        %v644 = vunpack.c.l.b16 %v362
        %v645 = vunpack.c.l.b16 %v363
        %v646 = vunpack.c.h.b16 %v363
        %v647 = vunpack.c.l.b16 %v364
        %v648 = vunpack.c.l.b16 %v365
        %v649 = vunpack.c.h.b16 %v365
        %v650 = vunpack.c.l.b16 %v366
        %v651 = vunpack.c.l.b16 %v367
        %v652 = vunpack.c.h.b16 %v367
        %v653 = vunpack.c.l.b16 %v368
        %v654 = vunpack.c.l.b16 %v369
        %v655 = vunpack.c.h.b16 %v369
        %v656 = vunpack.c.l.b16 %v370
        %v657 = vunpack.c.l.b16 %v371
        %v658 = vunpack.c.h.b16 %v371
        %v659 = vunpack.c.l.b16 %v372
        %v660 = vunpack.c.l.b16 %v373
        %v661 = vunpack.c.h.b16 %v373
        %v662 = vunpack.c.l.b16 %v374
        %v663 = vunpack.c.l.b16 %v375
        %v664 = vunpack.c.h.b16 %v375
        %v665 = vunpack.c.l.b16 %v376
        %v666 = vunpack.c.l.b16 %v377
        %v667 = vunpack.c.h.b16 %v377
        %v668 = vunpack.c.l.b16 %v378
        %v669 = vunpack.c.l.b16 %v379
        %v670 = vunpack.c.h.b16 %v379
        %v671 = vunpack.c.l.b16 %v380
        %v672 = vunpack.c.l.b16 %v381
        %v673 = vunpack.c.h.b16 %v381
        %v674 = vunpack.c.l.b16 %v382
        %v675 = vunpack.c.l.b16 %v383
        %v676 = vunpack.c.h.b16 %v383
        %v677 = vunpack.c.l.b16 %v384
        %v678 = vunpack.c.l.b16 %v385
        %v679 = vunpack.c.h.b16 %v385
        %v680 = vunpack.c.l.b16 %v386
        %v681 = vunpack.c.l.b16 %v387
        %v682 = vunpack.c.h.b16 %v387
        %v683 = vunpack.c.l.b16 %v388
        %v684 = vunpack.c.l.b16 %v389
        %v685 = vunpack.c.h.b16 %v389
        %v686 = vunpack.c.l.b16 %v390
        %v687 = vunpack.c.l.b16 %v391
        %v688 = vunpack.c.h.b16 %v391
        %v689 = vunpack.c.l.b16 %v392
        %v690 = vunpack.c.l.b16 %v393
        %v691 = vunpack.c.h.b16 %v393
        %v692 = vunpack.c.l.b16 %v394
        %v693 = vunpack.c.l.b16 %v395
        %v694 = vunpack.c.h.b16 %v395
        %v695 = vunpack.c.l.b16 %v396
        %v696 = vunpack.c.l.b16 %v397
        %v697 = vunpack.c.h.b16 %v397
        %v698 = vunpack.c.l.b16 %v398
        %v699 = vunpack.c.l.b16 %v399
        %v700 = vunpack.c.h.b16 %v399
        %v701 = vunpack.c.l.b16 %v400
        %v702 = vunpack.c.l.b16 %v401
        %v703 = vunpack.c.h.b16 %v401
        %v704 = vunpack.c.l.b16 %v402
        %v705 = vunpack.c.l.b16 %v403
        %v706 = vunpack.c.h.b16 %v403
        %v707 = vunpack.c.l.b16 %v404
        %v708 = vunpack.c.l.b16 %v405
        %v709 = vunpack.c.h.b16 %v405
        %v710 = vunpack.c.l.b16 %v406
        %v711 = vunpack.c.l.b16 %v407
        %v712 = vunpack.c.h.b16 %v407
        %v713 = vunpack.c.l.b16 %v408
        %v714 = vunpack.c.l.b16 %v409
        %v715 = vunpack.c.h.b16 %v409
        %v716 = vunpack.c.l.b16 %v410
        %v717 = vunpack.c.l.b16 %v411
        %v718 = vunpack.c.h.b16 %v411
        %v719 = vunpack.c.l.b16 %v412
        %v720 = vunpack.c.l.b16 %v413
        %v721 = vunpack.c.h.b16 %v413
        %v722 = vunpack.c.l.b16 %v414
        %v723 = vunpack.c.l.b16 %v415
        %v724 = vunpack.c.h.b16 %v415
        %v725 = vunpack.c.l.b16 %v416
        %v726 = vunpack.c.l.b16 %v417
        %v727 = vunpack.c.h.b16 %v417
        %v728 = vunpack.c.l.b16 %v418
        %v729 = vunpack.c.l.b16 %v419
        %v730 = vunpack.c.h.b16 %v419
        %v731 = vunpack.c.l.b16 %v420
        %v732 = vunpack.c.l.b16 %v421
        %v733 = vunpack.c.h.b16 %v421
        %v734 = vunpack.c.l.b16 %v422
        %v735 = vunpack.c.l.b16 %v423
        %v736 = vunpack.c.h.b16 %v423
        %v737 = vunpack.c.l.b16 %v424
        %v738 = vunpack.c.l.b16 %v425
        %v739 = vunpack.c.h.b16 %v425
        %v740 = vunpack.c.l.b16 %v426
        %v741 = vunpack.c.l.b16 %v427
        %v742 = vunpack.c.h.b16 %v427
        %v743 = vunpack.c.l.b16 %v428
        %v744 = vunpack.c.l.b16 %v429
        %v745 = vunpack.c.h.b16 %v429
        %v746 = vunpack.c.l.b16 %v430
        %v747 = vunpack.c.l.b16 %v431
        %v748 = vunpack.c.h.b16 %v431
        %v749 = vunpack.c.l.b16 %v432
        %v750 = vunpack.c.l.b16 %v433
        %v751 = vunpack.c.h.b16 %v433
        %v752 = vunpack.c.l.b16 %v434
        %v753 = vunpack.c.l.b16 %v435
        %v754 = vunpack.c.h.b16 %v435
        %v755 = vunpack.c.l.b16 %v436
        %v756 = vunpack.c.l.b16 %v437
        %v757 = vunpack.c.h.b16 %v437
        %v758 = vunpack.c.l.b16 %v438
        %v759 = vpack.c.b16 %v570, %v567
        %v760 = vpack.c.b16 %v571, %v568
        %v761 = vpack.c.b16 %v572, %v569
        %v762 = vpack.c.b16 %v576, %v573
        %v763 = vpack.c.b16 %v577, %v574
        %v764 = vpack.c.b16 %v578, %v575
        %v765 = vpack.c.b16 %v582, %v579
        %v766 = vpack.c.b16 %v583, %v580
        %v767 = vpack.c.b16 %v584, %v581
        %v768 = vpack.c.b16 %v588, %v585
        %v769 = vpack.c.b16 %v589, %v586
        %v770 = vpack.c.b16 %v590, %v587
        %v771 = vpack.c.b16 %v594, %v591
        %v772 = vpack.c.b16 %v595, %v592
        %v773 = vpack.c.b16 %v596, %v593
        %v774 = vpack.c.b16 %v600, %v597
        %v775 = vpack.c.b16 %v601, %v598
        %v776 = vpack.c.b16 %v602, %v599
        %v777 = vpack.c.b16 %v606, %v603
        %v778 = vpack.c.b16 %v607, %v604
        %v779 = vpack.c.b16 %v608, %v605
        %v780 = vpack.c.b16 %v612, %v609
        %v781 = vpack.c.b16 %v613, %v610
        %v782 = vpack.c.b16 %v614, %v611
        %v783 = vpack.c.b16 %v618, %v615
        %v784 = vpack.c.b16 %v619, %v616
        %v785 = vpack.c.b16 %v620, %v617
        %v786 = vpack.c.b16 %v624, %v621
        %v787 = vpack.c.b16 %v625, %v622
        %v788 = vpack.c.b16 %v626, %v623
        %v789 = vpack.c.b16 %v630, %v627
        %v790 = vpack.c.b16 %v631, %v628
        %v791 = vpack.c.b16 %v632, %v629
        %v792 = vpack.c.b16 %v636, %v633
        %v793 = vpack.c.b16 %v637, %v634
        %v794 = vpack.c.b16 %v638, %v635
        %v795 = vpack.c.b16 %v642, %v639
        %v796 = vpack.c.b16 %v643, %v640
        %v797 = vpack.c.b16 %v644, %v641
        %v798 = vpack.c.b16 %v648, %v645
        %v799 = vpack.c.b16 %v649, %v646
        %v800 = vpack.c.b16 %v650, %v647
        %v801 = vpack.c.b16 %v654, %v651
        %v802 = vpack.c.b16 %v655, %v652
        %v803 = vpack.c.b16 %v656, %v653
        %v804 = vpack.c.b16 %v660, %v657
        %v805 = vpack.c.b16 %v661, %v658
        %v806 = vpack.c.b16 %v662, %v659
        %v807 = vpack.c.b16 %v666, %v663
        %v808 = vpack.c.b16 %v667, %v664
        %v809 = vpack.c.b16 %v668, %v665
        %v810 = vpack.c.b16 %v672, %v669
        %v811 = vpack.c.b16 %v673, %v670
        %v812 = vpack.c.b16 %v674, %v671
        %v813 = vpack.c.b16 %v678, %v675
        %v814 = vpack.c.b16 %v679, %v676
        %v815 = vpack.c.b16 %v680, %v677
        %v816 = vpack.c.b16 %v684, %v681
        %v817 = vpack.c.b16 %v685, %v682
        %v818 = vpack.c.b16 %v686, %v683
        %v819 = vpack.c.b16 %v690, %v687
        %v820 = vpack.c.b16 %v691, %v688
        %v821 = vpack.c.b16 %v692, %v689
        %v822 = vpack.c.b16 %v696, %v693
        %v823 = vpack.c.b16 %v697, %v694
        %v824 = vpack.c.b16 %v698, %v695
        %v825 = vpack.c.b16 %v702, %v699
        %v826 = vpack.c.b16 %v703, %v700
        %v827 = vpack.c.b16 %v704, %v701
        %v828 = vpack.c.b16 %v708, %v705
        %v829 = vpack.c.b16 %v709, %v706
        %v830 = vpack.c.b16 %v710, %v707
        %v831 = vpack.c.b16 %v714, %v711
        %v832 = vpack.c.b16 %v715, %v712
        %v833 = vpack.c.b16 %v716, %v713
        %v834 = vpack.c.b16 %v720, %v717
        %v835 = vpack.c.b16 %v721, %v718
        %v836 = vpack.c.b16 %v722, %v719
        %v837 = vpack.c.b16 %v726, %v723
        %v838 = vpack.c.b16 %v727, %v724
        %v839 = vpack.c.b16 %v728, %v725
        %v840 = vpack.c.b16 %v732, %v729
        %v841 = vpack.c.b16 %v733, %v730
        %v842 = vpack.c.b16 %v734, %v731
        %v843 = vpack.c.b16 %v738, %v735
        %v844 = vpack.c.b16 %v739, %v736
        %v845 = vpack.c.b16 %v740, %v737
        %v846 = vpack.c.b16 %v744, %v741
        %v847 = vpack.c.b16 %v745, %v742
        %v848 = vpack.c.b16 %v746, %v743
        %v849 = vpack.c.b16 %v750, %v747
        %v850 = vpack.c.b16 %v751, %v748
        %v851 = vpack.c.b16 %v752, %v749
        %v852 = vpack.c.b16 %v756, %v753
        %v853 = vpack.c.b16 %v757, %v754
        %v854 = vpack.c.b16 %v758, %v755
        %951 = vmatprep.subr.bf16.mxu0 %v760
        %952 = vmatpush1.bf16.msra.mxu0 %v759
        %953 = vmatprep.subr.bf16.mxu0 %v763
        %954 = vmatpush1.bf16.msra.mxu0 %v762
        %955 = vmatprep.subr.bf16.mxu0 %v766
        %956 = vmatpush1.bf16.msra.mxu0 %v765
        %957 = vmatprep.subr.bf16.mxu0 %v769
        %958 = vmatpush1.bf16.msra.mxu0 %v768
        %959 = vmatprep.subr.bf16.mxu0 %v772
        %960 = vmatpush1.bf16.msra.mxu0 %v771
        %961 = vmatprep.subr.bf16.mxu0 %v775
        %962 = vmatpush1.bf16.msra.mxu0 %v774
        %963 = vmatprep.subr.bf16.mxu0 %v778
        %964 = vmatpush1.bf16.msra.mxu0 %v777
        %965 = vmatprep.subr.bf16.mxu0 %v781
        %966 = vmatpush1.bf16.msra.mxu0 %v780
        %967 = vmatprep.subr.bf16.mxu0 %v784
        %968 = vmatpush1.bf16.msra.mxu0 %v783
        %969 = vmatprep.subr.bf16.mxu0 %v787
        %970 = vmatpush1.bf16.msra.mxu0 %v786
        %971 = vmatprep.subr.bf16.mxu0 %v790
        %972 = vmatpush1.bf16.msra.mxu0 %v789
        %973 = vmatprep.subr.bf16.mxu0 %v793
        %974 = vmatpush1.bf16.msra.mxu0 %v792
        %975 = vmatprep.subr.bf16.mxu0 %v796
        %976 = vmatpush1.bf16.msra.mxu0 %v795
        %977 = vmatprep.subr.bf16.mxu0 %v799
        %978 = vmatpush1.bf16.msra.mxu0 %v798
        %979 = vmatprep.subr.bf16.mxu0 %v802
        %980 = vmatpush1.bf16.msra.mxu0 %v801
        %981 = vmatprep.subr.bf16.mxu0 %v805
        %982 = vmatpush1.bf16.msra.mxu0 %v804
        %983 = vmatprep.mubr.bf16.mxu0 %v308
        %984 = vmatmul.mubr.bf16.gmra.mrb[0].mxu0 %v307
        %v985 = vpop.f32.mrb[0].mxu0
        %v986 = vadd.f32 0.0, %v985
        %v987 = vpop.f32.mrb[0].mxu0
        %v988 = vadd.f32 0.0, %v987
        %v989 = vpop.f32.mrb[0].mxu0
        %v990 = vpop.f32.mrb[0].mxu0
        %991 = vdwg.mxu0
        %992 = vmatprep.subr.bf16.mxu0 %v808
        %993 = vmatpush1.bf16.msra.mxu0 %v807
        %994 = vmatprep.subr.bf16.mxu0 %v811
        %995 = vmatpush1.bf16.msra.mxu0 %v810
        %996 = vmatprep.subr.bf16.mxu0 %v814
        %997 = vmatpush1.bf16.msra.mxu0 %v813
        %998 = vmatprep.subr.bf16.mxu0 %v817
        %999 = vmatpush1.bf16.msra.mxu0 %v816
        %1000 = vmatprep.subr.bf16.mxu0 %v820
        %1001 = vmatpush1.bf16.msra.mxu0 %v819
        %1002 = vmatprep.subr.bf16.mxu0 %v823
        %1003 = vmatpush1.bf16.msra.mxu0 %v822
        %1004 = vmatprep.subr.bf16.mxu0 %v826
        %1005 = vmatpush1.bf16.msra.mxu0 %v825
        %1006 = vmatprep.subr.bf16.mxu0 %v829
        %1007 = vmatpush1.bf16.msra.mxu0 %v828
        %1008 = vmatprep.subr.bf16.mxu0 %v832
        %1009 = vmatpush1.bf16.msra.mxu0 %v831
        %1010 = vmatprep.subr.bf16.mxu0 %v835
        %1011 = vmatpush1.bf16.msra.mxu0 %v834
        %1012 = vmatprep.subr.bf16.mxu0 %v838
        %1013 = vmatpush1.bf16.msra.mxu0 %v837
        %1014 = vmatprep.subr.bf16.mxu0 %v841
        %1015 = vmatpush1.bf16.msra.mxu0 %v840
        %1016 = vmatprep.subr.bf16.mxu0 %v844
        %1017 = vmatpush1.bf16.msra.mxu0 %v843
        %1018 = vmatprep.subr.bf16.mxu0 %v847
        %1019 = vmatpush1.bf16.msra.mxu0 %v846
        %1020 = vmatprep.subr.bf16.mxu0 %v850
        %1021 = vmatpush1.bf16.msra.mxu0 %v849
        %1022 = vmatprep.subr.bf16.mxu0 %v853
        %1023 = vmatpush1.bf16.msra.mxu0 %v852
        %1024 = vmatprep.mubr.bf16.mxu0 %v310
        %1025 = vmatmul.mubr.bf16.gmra.mrb[0].mxu0 %v309
        %v1026 = vpop.f32.mrb[0].mxu0
        %v1027 = vadd.f32 %v986, %v1026
        %v1028 = vpop.f32.mrb[0].mxu0
        %v1029 = vadd.f32 %v988, %v1028
        %v1030 = vpop.f32.mrb[0].mxu0
        %v1031 = vpop.f32.mrb[0].mxu0
        %1032 = vdwg.mxu0
        %1033 = vmatprep.subr.bf16.mxu0 0
        %1034 = vmatpush1.bf16.msra.mxu0 %v761
        %1035 = vmatprep.subr.bf16.mxu0 0
        %1036 = vmatpush1.bf16.msra.mxu0 %v764
        %1037 = vmatprep.subr.bf16.mxu0 0
        %1038 = vmatpush1.bf16.msra.mxu0 %v767
        %1039 = vmatprep.subr.bf16.mxu0 0
        %1040 = vmatpush1.bf16.msra.mxu0 %v770
        %1041 = vmatprep.subr.bf16.mxu0 0
        %1042 = vmatpush1.bf16.msra.mxu0 %v773
        %1043 = vmatprep.subr.bf16.mxu0 0
        %1044 = vmatpush1.bf16.msra.mxu0 %v776
        %1045 = vmatprep.subr.bf16.mxu0 0
        %1046 = vmatpush1.bf16.msra.mxu0 %v779
        %1047 = vmatprep.subr.bf16.mxu0 0
        %1048 = vmatpush1.bf16.msra.mxu0 %v782
        %1049 = vmatprep.subr.bf16.mxu0 0
        %1050 = vmatpush1.bf16.msra.mxu0 %v785
        %1051 = vmatprep.subr.bf16.mxu0 0
        %1052 = vmatpush1.bf16.msra.mxu0 %v788
        %1053 = vmatprep.subr.bf16.mxu0 0
        %1054 = vmatpush1.bf16.msra.mxu0 %v791
        %1055 = vmatprep.subr.bf16.mxu0 0
        %1056 = vmatpush1.bf16.msra.mxu0 %v794
        %1057 = vmatprep.subr.bf16.mxu0 0
        %1058 = vmatpush1.bf16.msra.mxu0 %v797
        %1059 = vmatprep.subr.bf16.mxu0 0
        %1060 = vmatpush1.bf16.msra.mxu0 %v800
        %1061 = vmatprep.subr.bf16.mxu0 0
        %1062 = vmatpush1.bf16.msra.mxu0 %v803
        %1063 = vmatprep.subr.bf16.mxu0 0
        %1064 = vmatpush1.bf16.msra.mxu0 %v806
        %1065 = vmatprep.mubr.bf16.mxu0 %v308
        %1066 = vmatmul.mubr.bf16.gmra.mrb[0].mxu0 %v307
        %v1067 = vpop.f32.mrb[0].mxu0
        %v1068 = vadd.f32 0.0, %v1067
        %v1069 = vpop.f32.mrb[0].mxu0
        %v1070 = vpop.f32.mrb[0].mxu0
        %v1071 = vpop.f32.mrb[0].mxu0
        %1072 = vdwg.mxu0
        %1073 = vmatprep.subr.bf16.mxu0 0
        %1074 = vmatpush1.bf16.msra.mxu0 %v809
        %1075 = vmatprep.subr.bf16.mxu0 0
        %1076 = vmatpush1.bf16.msra.mxu0 %v812
        %1077 = vmatprep.subr.bf16.mxu0 0
        %1078 = vmatpush1.bf16.msra.mxu0 %v815
        %1079 = vmatprep.subr.bf16.mxu0 0
        %1080 = vmatpush1.bf16.msra.mxu0 %v818
        %1081 = vmatprep.subr.bf16.mxu0 0
        %1082 = vmatpush1.bf16.msra.mxu0 %v821
        %1083 = vmatprep.subr.bf16.mxu0 0
        %1084 = vmatpush1.bf16.msra.mxu0 %v824
        %1085 = vmatprep.subr.bf16.mxu0 0
        %1086 = vmatpush1.bf16.msra.mxu0 %v827
        %1087 = vmatprep.subr.bf16.mxu0 0
        %1088 = vmatpush1.bf16.msra.mxu0 %v830
        %1089 = vmatprep.subr.bf16.mxu0 0
        %1090 = vmatpush1.bf16.msra.mxu0 %v833
        %1091 = vmatprep.subr.bf16.mxu0 0
        %1092 = vmatpush1.bf16.msra.mxu0 %v836
        %1093 = vmatprep.subr.bf16.mxu0 0
        %1094 = vmatpush1.bf16.msra.mxu0 %v839
        %1095 = vmatprep.subr.bf16.mxu0 0
        %1096 = vmatpush1.bf16.msra.mxu0 %v842
        %1097 = vmatprep.subr.bf16.mxu0 0
        %1098 = vmatpush1.bf16.msra.mxu0 %v845
        %1099 = vmatprep.subr.bf16.mxu0 0
        %1100 = vmatpush1.bf16.msra.mxu0 %v848
        %1101 = vmatprep.subr.bf16.mxu0 0
        %1102 = vmatpush1.bf16.msra.mxu0 %v851
        %1103 = vmatprep.subr.bf16.mxu0 0
        %1104 = vmatpush1.bf16.msra.mxu0 %v854
        %1105 = vmatprep.mubr.bf16.mxu0 %v310
        %1106 = vmatmul.mubr.bf16.gmra.mrb[0].mxu0 %v309
        %v1107 = vpop.f32.mrb[0].mxu0
        %v1108 = vadd.f32 %v1068, %v1107
        %v1109 = vpop.f32.mrb[0].mxu0
        %v1110 = vpop.f32.mrb[0].mxu0
        %v1111 = vpop.f32.mrb[0].mxu0
        %1112 = vdwg.mxu0
        %v1115 = vcombine.low %v1027, %v1029
        %1117 = vst [vmem:[#allocation2] sm:$0xff] %v1115
        %1118 = vst [vmem:[#allocation2 + $0x8] sm:$0xf] %v1108
        %v1119 = vld [vmem:[%s3] sm:$0xf]
        %v1120 = vld [vmem:[#allocation2] sm:$0x33]
        %v1121 = vld [vmem:[#allocation2 + $0x8] sm:$0x3]
        %v1124 = vcombine.high %v1120, %v1120
        %vm1125 = vcmask 15360
        %v1127 = vsel %vm1125, %v1119, 0
        %vm1129 = vcmask 1041408
        %v1130 = vsel %vm1129, %v1120, 0
        %v1132 = vsel %vm1129, %v1124, 0
        %v1134 = vsel %vm1129, %v1121, 0
        %1136 = vmatprep.subr.mxu0 %v1132
        %1137 = vmatpush1.msra.mxu0 %v1130
        %1138 = vmatprep.subr.mxu0 0.0
        %1139 = vmatpush1.msra.mxu0 0.0
        %1140 = vmatprep.subr.mxu0 0.0
        %1141 = vmatpush1.msra.mxu0 0.0
        %1142 = vmatprep.subr.mxu0 0.0
        %1143 = vmatpush1.msra.mxu0 0.0
        %1144 = vmatprep.subr.mxu0 0.0
        %1145 = vmatpush1.msra.mxu0 0.0
        %1146 = vmatprep.subr.mxu0 0.0
        %1147 = vmatpush1.msra.mxu0 0.0
        %1148 = vmatprep.subr.mxu0 0.0
        %1149 = vmatpush1.msra.mxu0 0.0
        %1150 = vmatprep.subr.mxu0 0.0
        %1151 = vmatpush1.msra.mxu0 0.0
        %1152 = vmatprep.subr.mxu0 0.0
        %1153 = vmatpush1.msra.mxu0 0.0
        %1154 = vmatprep.subr.mxu0 0.0
        %1155 = vmatpush1.msra.mxu0 0.0
        %1156 = vmatprep.subr.mxu0 0.0
        %1157 = vmatpush1.msra.mxu0 0.0
        %1158 = vmatprep.subr.mxu0 0.0
        %1159 = vmatpush1.msra.mxu0 0.0
        %1160 = vmatprep.subr.mxu0 0.0
        %1161 = vmatpush1.msra.mxu0 0.0
        %1162 = vmatprep.subr.mxu0 0.0
        %1163 = vmatpush1.msra.mxu0 0.0
        %1164 = vmatprep.subr.mxu0 0.0
        %1165 = vmatpush1.msra.mxu0 0.0
        %1166 = vmatprep.subr.mxu0 0.0
        %1167 = vmatpush1.msra.mxu0 0.0
        %1168 = vmatprep.subr.mxu0 0.0
        %1169 = vmatpush1.msra.mxu0 0.0
        %1170 = vmatprep.subr.mxu0 0.0
        %1171 = vmatpush1.msra.mxu0 0.0
        %1172 = vmatprep.subr.mxu0 0.0
        %1173 = vmatpush1.msra.mxu0 0.0
        %1174 = vmatprep.subr.mxu0 0.0
        %1175 = vmatpush1.msra.mxu0 0.0
        %1176 = vmatprep.subr.mxu0 0.0
        %1177 = vmatpush1.msra.mxu0 0.0
        %1178 = vmatprep.subr.mxu0 0.0
        %1179 = vmatpush1.msra.mxu0 0.0
        %1180 = vmatprep.subr.mxu0 0.0
        %1181 = vmatpush1.msra.mxu0 0.0
        %1182 = vmatprep.subr.mxu0 0.0
        %1183 = vmatpush1.msra.mxu0 0.0
        %1184 = vmatprep.subr.mxu0 0.0
        %1185 = vmatpush1.msra.mxu0 0.0
        %1186 = vmatprep.subr.mxu0 0.0
        %1187 = vmatpush1.msra.mxu0 0.0
        %1188 = vmatprep.subr.mxu0 0.0
        %1189 = vmatpush1.msra.mxu0 0.0
        %1190 = vmatprep.subr.mxu0 0.0
        %1191 = vmatpush1.msra.mxu0 0.0
        %1192 = vmatprep.subr.mxu0 0.0
        %1193 = vmatpush1.msra.mxu0 0.0
        %1194 = vmatprep.subr.mxu0 0.0
        %1195 = vmatpush1.msra.mxu0 0.0
        %1196 = vmatprep.subr.mxu0 0.0
        %1197 = vmatpush1.msra.mxu0 0.0
        %1198 = vmatprep.subr.mxu0 0.0
        %1199 = vmatpush1.msra.mxu0 0.0
        %1200 = vmatprep.mubr.f32.mxu0 0.0
        %1201 = vmatmul.mubr.f32.gmra.mrb[0].mxu0 %v1127
        %v1202 = vpop.f32.mrb[0].mxu0
        %v1203 = vadd.f32 0.0, %v1202
        %v1204 = vpop.f32.mrb[0].mxu0
        %v1205 = vadd.f32 0.0, %v1204
        %1206 = vdwg.mxu0
        %1207 = vmatprep.subr.mxu0 0.0
        %1208 = vmatpush1.msra.mxu0 %v1134
        %1209 = vmatprep.subr.mxu0 0.0
        %1210 = vmatpush1.msra.mxu0 0.0
        %1211 = vmatprep.subr.mxu0 0.0
        %1212 = vmatpush1.msra.mxu0 0.0
        %1213 = vmatprep.subr.mxu0 0.0
        %1214 = vmatpush1.msra.mxu0 0.0
        %1215 = vmatprep.subr.mxu0 0.0
        %1216 = vmatpush1.msra.mxu0 0.0
        %1217 = vmatprep.subr.mxu0 0.0
        %1218 = vmatpush1.msra.mxu0 0.0
        %1219 = vmatprep.subr.mxu0 0.0
        %1220 = vmatpush1.msra.mxu0 0.0
        %1221 = vmatprep.subr.mxu0 0.0
        %1222 = vmatpush1.msra.mxu0 0.0
        %1223 = vmatprep.subr.mxu0 0.0
        %1224 = vmatpush1.msra.mxu0 0.0
        %1225 = vmatprep.subr.mxu0 0.0
        %1226 = vmatpush1.msra.mxu0 0.0
        %1227 = vmatprep.subr.mxu0 0.0
        %1228 = vmatpush1.msra.mxu0 0.0
        %1229 = vmatprep.subr.mxu0 0.0
        %1230 = vmatpush1.msra.mxu0 0.0
        %1231 = vmatprep.subr.mxu0 0.0
        %1232 = vmatpush1.msra.mxu0 0.0
        %1233 = vmatprep.subr.mxu0 0.0
        %1234 = vmatpush1.msra.mxu0 0.0
        %1235 = vmatprep.subr.mxu0 0.0
        %1236 = vmatpush1.msra.mxu0 0.0
        %1237 = vmatprep.subr.mxu0 0.0
        %1238 = vmatpush1.msra.mxu0 0.0
        %1239 = vmatprep.subr.mxu0 0.0
        %1240 = vmatpush1.msra.mxu0 0.0
        %1241 = vmatprep.subr.mxu0 0.0
        %1242 = vmatpush1.msra.mxu0 0.0
        %1243 = vmatprep.subr.mxu0 0.0
        %1244 = vmatpush1.msra.mxu0 0.0
        %1245 = vmatprep.subr.mxu0 0.0
        %1246 = vmatpush1.msra.mxu0 0.0
        %1247 = vmatprep.subr.mxu0 0.0
        %1248 = vmatpush1.msra.mxu0 0.0
        %1249 = vmatprep.subr.mxu0 0.0
        %1250 = vmatpush1.msra.mxu0 0.0
        %1251 = vmatprep.subr.mxu0 0.0
        %1252 = vmatpush1.msra.mxu0 0.0
        %1253 = vmatprep.subr.mxu0 0.0
        %1254 = vmatpush1.msra.mxu0 0.0
        %1255 = vmatprep.subr.mxu0 0.0
        %1256 = vmatpush1.msra.mxu0 0.0
        %1257 = vmatprep.subr.mxu0 0.0
        %1258 = vmatpush1.msra.mxu0 0.0
        %1259 = vmatprep.subr.mxu0 0.0
        %1260 = vmatpush1.msra.mxu0 0.0
        %1261 = vmatprep.subr.mxu0 0.0
        %1262 = vmatpush1.msra.mxu0 0.0
        %1263 = vmatprep.subr.mxu0 0.0
        %1264 = vmatpush1.msra.mxu0 0.0
        %1265 = vmatprep.subr.mxu0 0.0
        %1266 = vmatpush1.msra.mxu0 0.0
        %1267 = vmatprep.subr.mxu0 0.0
        %1268 = vmatpush1.msra.mxu0 0.0
        %1269 = vmatprep.subr.mxu0 0.0
        %1270 = vmatpush1.msra.mxu0 0.0
        %1271 = vmatprep.mubr.f32.mxu0 0.0
        %1272 = vmatmul.mubr.f32.gmra.mrb[0].mxu0 %v1127
        %v1273 = vpop.f32.mrb[0].mxu0
        %v1274 = vadd.f32 0.0, %v1273
        %v1275 = vpop.f32.mrb[0].mxu0
        %1276 = vdwg.mxu0
        %v1277 = vmul.f32 %v1203, 0.25
        %v1278 = vmul.f32 %v1205, 0.25
        %v1279 = vmul.f32 %v1274, 0.25
        %v1280 = vmul.f32 %v1203, 0.75
        %v1281 = vmul.f32 %v1205, 0.75
        %v1282 = vmul.f32 %v1274, 0.75
        %v1283 = vadd.f32 %v1277, %v1280
        %v1284 = vadd.f32 %v1278, %v1281
        %v1285 = vadd.f32 %v1279, %v1282
        %v1286 = vld [vmem:[%s259] sm:$0xf]
        %v1287 = vld [vmem:[%s259 + $0x8] sm:$0xf]
        %v1288 = vld [vmem:[%s259 + $0x10] sm:$0xf]
        %v1289 = vadd.f32 %v1286, %v1283
        %v1290 = vadd.f32 %v1287, %v1284
        %v1291 = vadd.f32 %v1288, %v1285
        %v1293 = vlaneseq
        %v1294 = vshrl.u32 %v1293, 7
        %v1295 = vsub.s32 0, %v1294
        %v1296 = vrot.slane %v296, %v1295
        %v1297 = vlaneseq
        %v1298 = vshrl.u32 %v1297, 7
        %v1299 = vsub.s32 1, %v1298
        %v1300 = vrot.slane %v296, %v1299
        %v1301 = vlaneseq
        %v1302 = vshrl.u32 %v1301, 7
        %v1303 = vsub.s32 2, %v1302
        %v1304 = vrot.slane %v296, %v1303
        %v1308 = vmul.f32 %v1289, %v1296
        %v1309 = vmul.f32 %v1290, %v1300
        %v1310 = vmul.f32 %v1291, %v1304
        %v1312 = vlaneseq
        %v1313 = vshrl.u32 %v1312, 7
        %v1314 = vsub.s32 0, %v1313
        %v1315 = vrot.slane %v298, %v1314
        %v1316 = vlaneseq
        %v1317 = vshrl.u32 %v1316, 7
        %v1318 = vsub.s32 1, %v1317
        %v1319 = vrot.slane %v298, %v1318
        %v1320 = vlaneseq
        %v1321 = vshrl.u32 %v1320, 7
        %v1322 = vsub.s32 2, %v1321
        %v1323 = vrot.slane %v298, %v1322
        %v1327 = vadd.f32 %v1308, %v1315
        %v1328 = vadd.f32 %v1309, %v1319
        %v1329 = vadd.f32 %v1310, %v1323
        %1330 = vst [vmem:[%s294] sm:$0xf] %v1327
        %1331 = vst [vmem:[%s294 + $0x8] sm:$0xf] %v1328
        %1332 = vst [vmem:[%s294 + $0x10] sm:$0xf] %v1329
        %v1333 = vld [vmem:[#allocation2] sm:$0xcc]
        %v1334 = vld [vmem:[#allocation2 + $0x8] sm:$0xc]
        %v1337 = vcombine.high %v1333, %v1333
        %v1338 = vrot.slane %v1333, 2
        %v1339 = vrot.slane %v1337, 2
        %v1340 = vrot.slane %v1334, 2
        %v1341 = vsel %vm1129, %v1338, 0
        %v1343 = vsel %vm1129, %v1339, 0
        %v1345 = vsel %vm1129, %v1340, 0
        %1347 = vmatprep.subr.mxu0 %v1343
        %1348 = vmatpush1.msra.mxu0 %v1341
        %1349 = vmatprep.subr.mxu0 0.0
        %1350 = vmatpush1.msra.mxu0 0.0
        %1351 = vmatprep.subr.mxu0 0.0
        %1352 = vmatpush1.msra.mxu0 0.0
        %1353 = vmatprep.subr.mxu0 0.0
        %1354 = vmatpush1.msra.mxu0 0.0
        %1355 = vmatprep.subr.mxu0 0.0
        %1356 = vmatpush1.msra.mxu0 0.0
        %1357 = vmatprep.subr.mxu0 0.0
        %1358 = vmatpush1.msra.mxu0 0.0
        %1359 = vmatprep.subr.mxu0 0.0
        %1360 = vmatpush1.msra.mxu0 0.0
        %1361 = vmatprep.subr.mxu0 0.0
        %1362 = vmatpush1.msra.mxu0 0.0
        %1363 = vmatprep.subr.mxu0 0.0
        %1364 = vmatpush1.msra.mxu0 0.0
        %1365 = vmatprep.subr.mxu0 0.0
        %1366 = vmatpush1.msra.mxu0 0.0
        %1367 = vmatprep.subr.mxu0 0.0
        %1368 = vmatpush1.msra.mxu0 0.0
        %1369 = vmatprep.subr.mxu0 0.0
        %1370 = vmatpush1.msra.mxu0 0.0
        %1371 = vmatprep.subr.mxu0 0.0
        %1372 = vmatpush1.msra.mxu0 0.0
        %1373 = vmatprep.subr.mxu0 0.0
        %1374 = vmatpush1.msra.mxu0 0.0
        %1375 = vmatprep.subr.mxu0 0.0
        %1376 = vmatpush1.msra.mxu0 0.0
        %1377 = vmatprep.subr.mxu0 0.0
        %1378 = vmatpush1.msra.mxu0 0.0
        %1379 = vmatprep.subr.mxu0 0.0
        %1380 = vmatpush1.msra.mxu0 0.0
        %1381 = vmatprep.subr.mxu0 0.0
        %1382 = vmatpush1.msra.mxu0 0.0
        %1383 = vmatprep.subr.mxu0 0.0
        %1384 = vmatpush1.msra.mxu0 0.0
        %1385 = vmatprep.subr.mxu0 0.0
        %1386 = vmatpush1.msra.mxu0 0.0
        %1387 = vmatprep.subr.mxu0 0.0
        %1388 = vmatpush1.msra.mxu0 0.0
        %1389 = vmatprep.subr.mxu0 0.0
        %1390 = vmatpush1.msra.mxu0 0.0
        %1391 = vmatprep.subr.mxu0 0.0
        %1392 = vmatpush1.msra.mxu0 0.0
        %1393 = vmatprep.subr.mxu0 0.0
        %1394 = vmatpush1.msra.mxu0 0.0
        %1395 = vmatprep.subr.mxu0 0.0
        %1396 = vmatpush1.msra.mxu0 0.0
        %1397 = vmatprep.subr.mxu0 0.0
        %1398 = vmatpush1.msra.mxu0 0.0
        %1399 = vmatprep.subr.mxu0 0.0
        %1400 = vmatpush1.msra.mxu0 0.0
        %1401 = vmatprep.subr.mxu0 0.0
        %1402 = vmatpush1.msra.mxu0 0.0
        %1403 = vmatprep.subr.mxu0 0.0
        %1404 = vmatpush1.msra.mxu0 0.0
        %1405 = vmatprep.subr.mxu0 0.0
        %1406 = vmatpush1.msra.mxu0 0.0
        %1407 = vmatprep.subr.mxu0 0.0
        %1408 = vmatpush1.msra.mxu0 0.0
        %1409 = vmatprep.subr.mxu0 0.0
        %1410 = vmatpush1.msra.mxu0 0.0
        %1411 = vmatprep.mubr.f32.mxu0 0.0
        %1412 = vmatmul.mubr.f32.gmra.mrb[0].mxu0 %v1127
        %v1413 = vpop.f32.mrb[0].mxu0
        %v1414 = vadd.f32 0.0, %v1413
        %v1415 = vpop.f32.mrb[0].mxu0
        %v1416 = vadd.f32 0.0, %v1415
        %1417 = vdwg.mxu0
        %1418 = vmatprep.subr.mxu0 0.0
        %1419 = vmatpush1.msra.mxu0 %v1345
        %1420 = vmatprep.subr.mxu0 0.0
        %1421 = vmatpush1.msra.mxu0 0.0
        %1422 = vmatprep.subr.mxu0 0.0
        %1423 = vmatpush1.msra.mxu0 0.0
        %1424 = vmatprep.subr.mxu0 0.0
        %1425 = vmatpush1.msra.mxu0 0.0
        %1426 = vmatprep.subr.mxu0 0.0
        %1427 = vmatpush1.msra.mxu0 0.0
        %1428 = vmatprep.subr.mxu0 0.0
        %1429 = vmatpush1.msra.mxu0 0.0
        %1430 = vmatprep.subr.mxu0 0.0
        %1431 = vmatpush1.msra.mxu0 0.0
        %1432 = vmatprep.subr.mxu0 0.0
        %1433 = vmatpush1.msra.mxu0 0.0
        %1434 = vmatprep.subr.mxu0 0.0
        %1435 = vmatpush1.msra.mxu0 0.0
        %1436 = vmatprep.subr.mxu0 0.0
        %1437 = vmatpush1.msra.mxu0 0.0
        %1438 = vmatprep.subr.mxu0 0.0
        %1439 = vmatpush1.msra.mxu0 0.0
        %1440 = vmatprep.subr.mxu0 0.0
        %1441 = vmatpush1.msra.mxu0 0.0
        %1442 = vmatprep.subr.mxu0 0.0
        %1443 = vmatpush1.msra.mxu0 0.0
        %1444 = vmatprep.subr.mxu0 0.0
        %1445 = vmatpush1.msra.mxu0 0.0
        %1446 = vmatprep.subr.mxu0 0.0
        %1447 = vmatpush1.msra.mxu0 0.0
        %1448 = vmatprep.subr.mxu0 0.0
        %1449 = vmatpush1.msra.mxu0 0.0
        %1450 = vmatprep.subr.mxu0 0.0
        %1451 = vmatpush1.msra.mxu0 0.0
        %1452 = vmatprep.subr.mxu0 0.0
        %1453 = vmatpush1.msra.mxu0 0.0
        %1454 = vmatprep.subr.mxu0 0.0
        %1455 = vmatpush1.msra.mxu0 0.0
        %1456 = vmatprep.subr.mxu0 0.0
        %1457 = vmatpush1.msra.mxu0 0.0
        %1458 = vmatprep.subr.mxu0 0.0
        %1459 = vmatpush1.msra.mxu0 0.0
        %1460 = vmatprep.subr.mxu0 0.0
        %1461 = vmatpush1.msra.mxu0 0.0
        %1462 = vmatprep.subr.mxu0 0.0
        %1463 = vmatpush1.msra.mxu0 0.0
        %1464 = vmatprep.subr.mxu0 0.0
        %1465 = vmatpush1.msra.mxu0 0.0
        %1466 = vmatprep.subr.mxu0 0.0
        %1467 = vmatpush1.msra.mxu0 0.0
        %1468 = vmatprep.subr.mxu0 0.0
        %1469 = vmatpush1.msra.mxu0 0.0
        %1470 = vmatprep.subr.mxu0 0.0
        %1471 = vmatpush1.msra.mxu0 0.0
        %1472 = vmatprep.subr.mxu0 0.0
        %1473 = vmatpush1.msra.mxu0 0.0
        %1474 = vmatprep.subr.mxu0 0.0
        %1475 = vmatpush1.msra.mxu0 0.0
        %1476 = vmatprep.subr.mxu0 0.0
        %1477 = vmatpush1.msra.mxu0 0.0
        %1478 = vmatprep.subr.mxu0 0.0
        %1479 = vmatpush1.msra.mxu0 0.0
        %1480 = vmatprep.subr.mxu0 0.0
        %1481 = vmatpush1.msra.mxu0 0.0
        %1482 = vmatprep.mubr.f32.mxu0 0.0
        %1483 = vmatmul.mubr.f32.gmra.mrb[0].mxu0 %v1127
        %v1484 = vpop.f32.mrb[0].mxu0
        %v1485 = vadd.f32 0.0, %v1484
        %v1486 = vpop.f32.mrb[0].mxu0
        %1487 = vdwg.mxu0
        %v1488 = vmul.f32 %v1414, 0.25
        %v1489 = vmul.f32 %v1416, 0.25
        %v1490 = vmul.f32 %v1485, 0.25
        %v1491 = vadd.f32 %v1280, %v1488
        %v1492 = vadd.f32 %v1281, %v1489
        %v1493 = vadd.f32 %v1282, %v1490
        %v1494 = vld [vmem:[%s259] sm:$0xf0]
        %v1495 = vld [vmem:[%s259 + $0x8] sm:$0xf0]
        %v1496 = vld [vmem:[%s259 + $0x10] sm:$0xf0]
        %v1500 = vrot.slane %v1491, 4
        %v1501 = vrot.slane %v1492, 4
        %v1502 = vrot.slane %v1493, 4
        %v1506 = vadd.f32 %v1494, %v1500
        %v1507 = vadd.f32 %v1495, %v1501
        %v1508 = vadd.f32 %v1496, %v1502
        %v1509 = vmul.f32 %v1506, %v1296
        %v1510 = vmul.f32 %v1507, %v1300
        %v1511 = vmul.f32 %v1508, %v1304
        %v1512 = vadd.f32 %v1509, %v1315
        %v1513 = vadd.f32 %v1510, %v1319
        %v1514 = vadd.f32 %v1511, %v1323
        %1515 = vst [vmem:[%s294] sm:$0xf0] %v1512
        %1516 = vst [vmem:[%s294 + $0x8] sm:$0xf0] %v1513
        %1517 = vst [vmem:[%s294 + $0x10] sm:$0xf0] %v1514
        %v1518 = vmul.f32 %v1414, 0.75
        %v1519 = vmul.f32 %v1416, 0.75
        %v1520 = vmul.f32 %v1485, 0.75
        %v1521 = vadd.f32 %v1277, %v1518
        %v1522 = vadd.f32 %v1278, %v1519
        %v1523 = vadd.f32 %v1279, %v1520
        %v1524 = vld [vmem:[%s259 + $0x18] sm:$0xf]
        %v1525 = vld [vmem:[%s259 + $0x20] sm:$0xf]
        %v1526 = vld [vmem:[%s259 + $0x28] sm:$0xf]
        %v1527 = vadd.f32 %v1524, %v1521
        %v1528 = vadd.f32 %v1525, %v1522
        %v1529 = vadd.f32 %v1526, %v1523
        %v1530 = vmul.f32 %v1527, %v1296
        %v1531 = vmul.f32 %v1528, %v1300
        %v1532 = vmul.f32 %v1529, %v1304
        %v1533 = vadd.f32 %v1530, %v1315
        %v1534 = vadd.f32 %v1531, %v1319
        %v1535 = vadd.f32 %v1532, %v1323
        %1536 = vst [vmem:[%s294 + $0x18] sm:$0xf] %v1533
        %1537 = vst [vmem:[%s294 + $0x20] sm:$0xf] %v1534
        %1538 = vst [vmem:[%s294 + $0x28] sm:$0xf] %v1535
        %v1539 = vld [vmem:[%s259 + $0x18] sm:$0xf0]
        %v1540 = vld [vmem:[%s259 + $0x20] sm:$0xf0]
        %v1541 = vld [vmem:[%s259 + $0x28] sm:$0xf0]
        %v1545 = vrot.slane %v1414, 4
        %v1546 = vrot.slane %v1416, 4
        %v1547 = vrot.slane %v1485, 4
        %v1551 = vadd.f32 %v1539, %v1545
        %v1552 = vadd.f32 %v1540, %v1546
        %v1553 = vadd.f32 %v1541, %v1547
        %v1554 = vmul.f32 %v1551, %v1296
        %v1555 = vmul.f32 %v1552, %v1300
        %v1556 = vmul.f32 %v1553, %v1304
        %v1557 = vadd.f32 %v1554, %v1315
        %v1558 = vadd.f32 %v1555, %v1319
        %v1559 = vadd.f32 %v1556, %v1323
        %1560 = vst [vmem:[%s294 + $0x18] sm:$0xf0] %v1557
        %1561 = vst [vmem:[%s294 + $0x20] sm:$0xf0] %v1558
        %1562 = vst [vmem:[%s294 + $0x28] sm:$0xf0] %v1559
        %s1563 = sand.u32 %s148, 1
        %s1564 = scalar_lea.sflag [#allocation5], %s1563
        %s1565 = sand.u32 %s148, 1
        %s1566 = smul.addr %s1565, 48
        %s1567 = scalar_lea.vmem [#allocation9], %s1566
        // Predicated region
        $region53: #{tpu_custom_call.1} parent=39 // pred_check
          %p1568 = pneg %p158
        $region54: #{tpu_custom_call.1} parent=39 // pred_check_branch
          %1570 = sbr.rel (%p1568) target = $region56
        $region55: #{tpu_custom_call.1} parent=39 // pred_region
          %s1572 = ssub.s32 768, 768
          %1573 = vsyncadd %s1564, %s1572
          %s1574 = smul.addr %s25, 6
          %s1575 = smul.addr %s1574, 128
          %s1576 = scalar_lea.hbm %s5, %s1575
          %s1577 = sshll.u32 %s1567, 4
          %s1578 = int_to_ptr.vmem [resolvable:$true] %s1577
          %1583 = dma.vmem_to_hbm [thread:$0]  %s1578, 768, %s1576, %s1564, 384, 384, 24
        $region56: #{tpu_custom_call.1} parent=39 // pred_fallthru
          _
      $region40: #{tpu_custom_call.1} parent=5 // pred_fallthru
        _
      %p1584 = scmp.le.s32.totalorder 2, %s20
      // Predicated region
      $region57: #{tpu_custom_call.1} parent=5 // pred_check
        %p1585 = pneg %p1584
      $region58: #{tpu_custom_call.1} parent=5 // pred_check_branch
        %1587 = sbr.rel (%p1585) target = $region60
      $region59: #{tpu_custom_call.1} parent=5 // pred_region
        %s1588 = ssub.s32 %s20, 2
        // Predicated region
        $region61: #{tpu_custom_call.1} parent=59 // pred_check
          %p1589 = pneg %p164
        $region62: #{tpu_custom_call.1} parent=59 // pred_check_branch
          %1591 = sbr.rel (%p1589) target = $region64
        $region63: #{tpu_custom_call.1} parent=59 // pred_region
          %s1592 = sand.u32 %s149, 1
          %s1593 = scalar_lea.sflag [#allocation5], %s1592
          %s1594 = sand.u32 %s149, 1
          %s1595 = smul.addr %s1594, 48
          %s1596 = scalar_lea.vmem [#allocation9], %s1595
          %1597 = dma.done %s1593, 768
        $region64: #{tpu_custom_call.1} parent=59 // pred_fallthru
          _
      $region60: #{tpu_custom_call.1} parent=5 // pred_fallthru
        _
    $region6: #{tpu_custom_call.1} parent=1 // loop_footer
      %s24 = sadd.s32 1, %s20
    $region7: #{tpu_custom_call.1} parent=1 // loop_footer_branch
      %19 = sbr.rel target = $region3
    $region8: #{tpu_custom_call.1} parent=1 // loop_exit
      _
    %1598 = vsyncpa [#allocation4], 1
    %s1599 = scalar_lea.sflag [#allocation4], 1
    %1600 = vsyncpa %s1599, 1
    %1601 = vsyncpa [#allocation7], 1
    %s1602 = scalar_lea.sflag [#allocation7], 1
    %1603 = vsyncpa %s1602, 1
    %1604 = vsyncpa [#allocation5], 1
    %s1605 = scalar_lea.sflag [#allocation5], 1
    %1606 = vsyncpa %s1605, 1

</llo_original>
